<compile_context>
chip_gen: v5e
topology: v5e:2x2
jax: 0.10.0
libtpu: 0.0.40
codegen_flags: <defaults>
</compile_context>

<pallas_src>
import numpy as np
import jax
import jax.numpy as jnp
from jax.experimental import pallas as pl
from jax.experimental.pallas import tpu as pltpu

jax.config.update("jax_default_matmul_precision", "highest")


# ---------------------------------------------------------------- batch tiling helper
def _batch_tile(B, tb_max=128):
    """Return (padded_B, TB). TB == B when B fits a single tile, else a multiple of 8."""
    if B <= tb_max:
        return B, B
    tb = max(8, (tb_max // 8) * 8)
    Bp = ((B + tb - 1) // tb) * tb
    return Bp, tb


def _full_spec(a):
    # whole-array block, resident across all grid steps
    return pl.BlockSpec(a.shape, lambda i, _nd=a.ndim: (0,) * _nd)


# ---------------------------------------------------------------- kernel 1: content + gate (fused)
def _content_gate_kernel(emb_ref, x_ref,
                         wa1_ref, ba1_ref, wa2_ref, ba2_ref, wagg_ref, bagg_ref,
                         w1_ref, b1_ref, w2_ref, b2_ref,
                         g1_ref, g2_ref, gb_ref, out_ref):
    TB, L, H1 = emb_ref.shape
    emb = emb_ref[...]                                   # (TB, L, H1)

    # --- word attention: fold L into the matmul M dimension -----------------
    emb2 = emb.reshape(TB * L, H1)
    s1 = jnp.tanh(jnp.dot(emb2, wa1_ref[...],
                          preferred_element_type=jnp.float32) + ba1_ref[...])      # (TB*L, H1)
    s2 = jnp.tanh(jnp.dot(s1, wa2_ref[...],
                          preferred_element_type=jnp.float32) + ba2_ref[...])      # (TB*L, A)
    A = s2.shape[-1]
    s2 = s2.reshape(TB, L, A)
    m = jnp.max(s2, axis=1, keepdims=True)
    e = jnp.exp(s2 - m)
    sm = e / jnp.sum(e, axis=1, keepdims=True)           # softmax over words (torch dim=1)

    # aggregation Linear(A, 1) folded over A first, then reduce over L:
    #   z_content[b,h] = tanh( sum_l (sum_a sm[b,l,a]*w_agg[a]) * emb[b,l,h] + b_agg )
    wl = jnp.sum(sm * wagg_ref[...][None, :, :], axis=-1, keepdims=True)            # (TB, L, 1)
    z_content = jnp.tanh(jnp.sum(wl * emb, axis=1) + bagg_ref[...])                 # (TB, H1)

    # --- rating path + gating fusion ----------------------------------------
    x = x_ref[...]                                       # (TB, U)
    z1 = jnp.tanh(jnp.dot(x, w1_ref[...],
                          preferred_element_type=jnp.float32) + b1_ref[...])        # (TB, H0)
    z_rating = jnp.tanh(jnp.dot(z1, w2_ref[...],
                                preferred_element_type=jnp.float32) + b2_ref[...])  # (TB, H1)
    gate = jax.nn.sigmoid(
        jnp.dot(z_rating, g1_ref[...], preferred_element_type=jnp.float32)
        + jnp.dot(z_content, g2_ref[...], preferred_element_type=jnp.float32)
        + gb_ref[...])
    out_ref[...] = gate * z_rating + (1.0 - gate) * z_content


def content_gate(word_emb, x, w_att1, b_att1, w_att2, b_att2, w_agg, b_agg,
                 w1, b1, w2, b2, g1, g2, gb, *, tb_max=128):
    B, L, H1 = word_emb.shape
    U = x.shape[1]
    Bp, TB = _batch_tile(B, tb_max)
    if Bp != B:
        word_emb = jnp.pad(word_emb, ((0, Bp - B), (0, 0), (0, 0)))
        x = jnp.pad(x, ((0, Bp - B), (0, 0)))
    # pre-transpose PyTorch (out,in) weights once -> (in,out); gate matrices used as-is.
    wa1t, wa2t, w1t, w2t = w_att1.T, w_att2.T, w1.T, w2.T

    out = pl.pallas_call(
        _content_gate_kernel,
        out_shape=jax.ShapeDtypeStruct((Bp, H1), jnp.float32),
        grid=(Bp // TB,),
        in_specs=[
            pl.BlockSpec((TB, L, H1), lambda i: (i, 0, 0)),
            pl.BlockSpec((TB, U), lambda i: (i, 0)),
            _full_spec(wa1t), _full_spec(b_att1), _full_spec(wa2t), _full_spec(b_att2),
            _full_spec(w_agg), _full_spec(b_agg),
            _full_spec(w1t), _full_spec(b1), _full_spec(w2t), _full_spec(b2),
            _full_spec(g1), _full_spec(g2), _full_spec(gb),
        ],
        out_specs=pl.BlockSpec((TB, H1), lambda i: (i, 0)),
        compiler_params=pltpu.CompilerParams(dimension_semantics=("parallel",)),
    )(word_emb, x, wa1t, b_att1, wa2t, b_att2, w_agg, b_agg, w1t, b1, w2t, b2, g1, g2, gb)
    return out[:B]


# ---------------------------------------------------------------- kernel 2: neighbor attn + head
def _neighbor_kernel(ge_ref, ne_ref, na_ref, w3_ref, b3_ref, w4_ref, b4_ref, out_ref):
    ge = ge_ref[...]                                     # (TB, H1)
    ne = ne_ref[...]                                     # (TB, N, H1)

    q = jnp.dot(ge, na_ref[...], preferred_element_type=jnp.float32)                # (TB, H1)
    s = jnp.einsum('bqh,bnh->bqn', q[:, None, :], ne,
                   preferred_element_type=jnp.float32)                              # (TB, 1, N)
    s = jnp.where(s == 0.0, -jnp.inf, s)                 # mask padded neighbors (matches reference)
    m = jnp.max(s, axis=-1, keepdims=True)
    e = jnp.exp(s - m)
    sm = e / jnp.sum(e, axis=-1, keepdims=True)
    sm = jnp.where(jnp.isnan(sm), 0.0, sm)               # all-(-inf) row -> zeros
    gne = jnp.einsum('bqn,bnh->bqh', sm, ne,
                     preferred_element_type=jnp.float32)[:, 0, :]                   # (TB, H1)

    z3 = jnp.tanh(jnp.dot(ge, w3_ref[...],
                          preferred_element_type=jnp.float32) + b3_ref[...])        # (TB, H2)
    z3n = jnp.tanh(jnp.dot(gne, w3_ref[...],
                           preferred_element_type=jnp.float32) + b3_ref[...])       # (TB, H2)
    # folded head: one w4 matmul instead of two
    out_ref[...] = jax.nn.sigmoid(
        jnp.dot(z3 + z3n, w4_ref[...], preferred_element_type=jnp.float32) + b4_ref[...])


def neighbor_predict(ge, neigh, na, w3, b3, w4, b4, *, tb_max=128):
    B, H1 = ge.shape
    N = neigh.shape[1]
    U = w4.shape[0]
    Bp, TB = _batch_tile(B, tb_max)
    if Bp != B:
        ge = jnp.pad(ge, ((0, Bp - B), (0, 0)))
        neigh = jnp.pad(neigh, ((0, Bp - B), (0, 0), (0, 0)))
    w3t, w4t = w3.T, w4.T

    out = pl.pallas_call(
        _neighbor_kernel,
        out_shape=jax.ShapeDtypeStruct((Bp, U), jnp.float32),
        grid=(Bp // TB,),
        in_specs=[
            pl.BlockSpec((TB, H1), lambda i: (i, 0)),
            pl.BlockSpec((TB, N, H1), lambda i: (i, 0, 0)),
            _full_spec(na), _full_spec(w3t), _full_spec(b3), _full_spec(w4t), _full_spec(b4),
        ],
        out_specs=pl.BlockSpec((TB, U), lambda i: (i, 0)),
        compiler_params=pltpu.CompilerParams(dimension_semantics=("parallel",)),
    )(ge, neigh, na, w3t, b3, w4t, b4)
    return out[:B]


# ---------------------------------------------------------------- full forward (glue + kernels)
def gate_forward(p, batch_item_index, batch_x, batch_word_seq, batch_neighbor_index, *, tb_max=128):
    # content path: gather word embeddings (padding row is zero, matching padding_idx)
    word_emb = p["word_embedding"][batch_word_seq]                          # (B, L, H1)
    gated_embedding = content_gate(
        word_emb, batch_x,
        p["w_att1"], p["b_att1"], p["w_att2"], p["b_att2"], p["w_agg"], p["b_agg"],
        p["w1"], p["b1"], p["w2"], p["b2"],
        p["gate_matrix1"], p["gate_matrix2"], p["gate_bias"], tb_max=tb_max)
    # functional equivalent of: item_gated_embedding.weight[batch_item_index] = gated_embedding
    item_table = p["item_gated_embedding"].at[batch_item_index].set(gated_embedding)
    neigh = item_table[batch_neighbor_index]                                # (B, N, H1)
    y_pred = neighbor_predict(gated_embedding, neigh, p["neighbor_attention"],
                              p["w3"], p["b3"], p["w4"], p["b4"], tb_max=tb_max)
    return y_pred, item_table


# ---------------------------------------------------------------- pure-JAX reference
def gate_forward_ref(p, batch_item_index, batch_x, batch_word_seq, batch_neighbor_index):
    emb = p["word_embedding"][batch_word_seq]
    s1 = jnp.tanh(emb @ p["w_att1"].T + p["b_att1"])
    s2 = jnp.tanh(s1 @ p["w_att2"].T + p["b_att2"])
    m = jnp.max(s2, axis=1, keepdims=True)
    e = jnp.exp(s2 - m)
    sm = e / jnp.sum(e, axis=1, keepdims=True)
    mz = jnp.einsum("blh,bla->bha", emb, sm)
    z_content = jnp.tanh((mz @ p["w_agg"].T + p["b_agg"])[..., 0])
    z1 = jnp.tanh(batch_x @ p["w1"].T + p["b1"])
    z_rating = jnp.tanh(z1 @ p["w2"].T + p["b2"])
    gate = jax.nn.sigmoid(z_rating @ p["gate_matrix1"] + z_content @ p["gate_matrix2"] + p["gate_bias"])
    ge = gate * z_rating + (1.0 - gate) * z_content
    item_table = p["item_gated_embedding"].at[batch_item_index].set(ge)
    ne = item_table[batch_neighbor_index]
    s = jnp.einsum("bh,hk->bk", ge, p["neighbor_attention"])
    s = jnp.einsum("bk,bnk->bn", s, ne)
    s = jnp.where(s == 0.0, -jnp.inf, s)
    m2 = jnp.max(s, axis=-1, keepdims=True)
    e2 = jnp.exp(s - m2)
    sm2 = e2 / jnp.sum(e2, axis=-1, keepdims=True)
    sm2 = jnp.where(jnp.isnan(sm2), 0.0, sm2)
    gne = jnp.einsum("bn,bnh->bh", sm2, ne)
    z3 = jnp.tanh(ge @ p["w3"].T + p["b3"])
    z3n = jnp.tanh(gne @ p["w3"].T + p["b3"])
    return jax.nn.sigmoid(z3 @ p["w4"].T + p["b4"] + z3n @ p["w4"].T)


# ---------------------------------------------------------------- param init
def init_params(key, num_users, num_items, num_words, H, att_dim):
    H0, H1, H2 = H
    ks = jax.random.split(key, 16)
    n = lambda k, shape, s=0.1: (s * jax.random.normal(k, shape)).astype(jnp.float32)
    p = {
        # embedding tables; padding rows (last row) are zeroed like padding_idx
        "item_gated_embedding": n(ks[0], (num_items + 1, H1)).at[num_items].set(0.0),
        "word_embedding": n(ks[1], (num_words + 1, H1)).at[num_words].set(0.0),
        # aggregation / att1 / att2 (PyTorch Linear: weight is (out, in))
        "w_agg": n(ks[2], (1, att_dim)),   "b_agg": n(ks[3], (1, 1)),
        "w_att1": n(ks[4], (H1, H1)),      "b_att1": n(ks[5], (1, H1)),
        "w_att2": n(ks[6], (att_dim, H1)), "b_att2": n(ks[7], (1, att_dim)),
        # linear1..linear4
        "w1": n(ks[8], (H0, num_users)),   "b1": n(ks[9], (1, H0)),
        "w2": n(ks[10], (H1, H0)),         "b2": n(ks[11], (1, H1)),
        "w3": n(ks[12], (H2, H1)),         "b3": n(ks[13], (1, H2)),
        "w4": n(ks[14], (num_users, H2)),  "b4": n(ks[15], (1, num_users)),
    }
    k2 = jax.random.split(jax.random.fold_in(key, 123), 4)
    p["neighbor_attention"] = n(k2[0], (H1, H1))
    p["gate_matrix1"] = n(k2[1], (H1, H1))
    p["gate_matrix2"] = n(k2[2], (H1, H1))
    p["gate_bias"] = n(k2[3], (1, H1))
    return p


if __name__ == "__main__":
    # small, forward-consistent shapes
    num_users, num_items, num_words = 32, 16, 64
    H = (24, 32, 16)
    att_dim = 8
    B, L, N = 4, 8, 5

    key = jax.random.PRNGKey(0)
    pkey, dkey = jax.random.split(key)
    params = init_params(pkey, num_users, num_items, num_words, H, att_dim)

    k1, k2, k3 = jax.random.split(dkey, 3)
    batch_item_index = jnp.arange(B, dtype=jnp.int32)                        # distinct items
    batch_x = jax.random.normal(k1, (B, num_users), dtype=jnp.float32)
    batch_word_seq = jax.random.randint(k2, (B, L), 0, num_words, dtype=jnp.int32)
    batch_neighbor_index = jax.random.randint(k3, (B, N), 0, num_items, dtype=jnp.int32)
    # force some padding neighbors (index == num_items -> zero row -> masked by -inf)
    batch_neighbor_index = batch_neighbor_index.at[:, -1].set(num_items)

    y_pred, _ = gate_forward(params, batch_item_index, batch_x, batch_word_seq, batch_neighbor_index)
    y_pred = jax.block_until_ready(y_pred)

    y_ref = jax.block_until_ready(
        gate_forward_ref(params, batch_item_index, batch_x, batch_word_seq, batch_neighbor_index)
    )
    np.testing.assert_allclose(np.asarray(y_pred), np.asarray(y_ref), rtol=2e-3, atol=2e-3)

    print("KERNEL_OK")
</pallas_src>

<mosaic_0001>
module attributes {stable_mosaic.version = 11 : i64} {
  func.func @_content_gate_kernel(%arg0: i32, %arg1: memref<4x8x32xf32, #tpu.memory_space<vmem>>, %arg2: memref<4x32xf32, #tpu.memory_space<vmem>>, %arg3: memref<32x32xf32, #tpu.memory_space<vmem>>, %arg4: memref<1x32xf32, #tpu.memory_space<vmem>>, %arg5: memref<32x8xf32, #tpu.memory_space<vmem>>, %arg6: memref<1x8xf32, #tpu.memory_space<vmem>>, %arg7: memref<1x8xf32, #tpu.memory_space<vmem>>, %arg8: memref<1x1xf32, #tpu.memory_space<vmem>>, %arg9: memref<32x24xf32, #tpu.memory_space<vmem>>, %arg10: memref<1x24xf32, #tpu.memory_space<vmem>>, %arg11: memref<24x32xf32, #tpu.memory_space<vmem>>, %arg12: memref<1x32xf32, #tpu.memory_space<vmem>>, %arg13: memref<32x32xf32, #tpu.memory_space<vmem>>, %arg14: memref<32x32xf32, #tpu.memory_space<vmem>>, %arg15: memref<1x32xf32, #tpu.memory_space<vmem>>, %arg16: memref<4x32xf32, #tpu.memory_space<vmem>>) attributes {dimension_semantics = [#tpu.dimension_semantics<parallel>], iteration_bounds = array<i64: 1>, scalar_prefetch = 0 : i64, scratch_operands = 0 : i64, tpu.core_type = #tpu.core_type<tc>, window_params = [{transform_indices = @transform_0, window_bounds = array<i64: 4, 8, 32>}, {transform_indices = @transform_1, window_bounds = array<i64: 4, 32>}, {pipeline_mode = #tpu.pipeline_mode<synchronous>, transform_indices = @transform_2, window_bounds = array<i64: 32, 32>}, {pipeline_mode = #tpu.pipeline_mode<synchronous>, transform_indices = @transform_3, window_bounds = array<i64: 1, 32>}, {pipeline_mode = #tpu.pipeline_mode<synchronous>, transform_indices = @transform_4, window_bounds = array<i64: 32, 8>}, {pipeline_mode = #tpu.pipeline_mode<synchronous>, transform_indices = @transform_5, window_bounds = array<i64: 1, 8>}, {pipeline_mode = #tpu.pipeline_mode<synchronous>, transform_indices = @transform_6, window_bounds = array<i64: 1, 8>}, {pipeline_mode = #tpu.pipeline_mode<synchronous>, transform_indices = @transform_7, window_bounds = array<i64: 1, 1>}, {pipeline_mode = #tpu.pipeline_mode<synchronous>, transform_indices = @transform_8, window_bounds = array<i64: 32, 24>}, {pipeline_mode = #tpu.pipeline_mode<synchronous>, transform_indices = @transform_9, window_bounds = array<i64: 1, 24>}, {pipeline_mode = #tpu.pipeline_mode<synchronous>, transform_indices = @transform_10, window_bounds = array<i64: 24, 32>}, {pipeline_mode = #tpu.pipeline_mode<synchronous>, transform_indices = @transform_11, window_bounds = array<i64: 1, 32>}, {pipeline_mode = #tpu.pipeline_mode<synchronous>, transform_indices = @transform_12, window_bounds = array<i64: 32, 32>}, {pipeline_mode = #tpu.pipeline_mode<synchronous>, transform_indices = @transform_13, window_bounds = array<i64: 32, 32>}, {pipeline_mode = #tpu.pipeline_mode<synchronous>, transform_indices = @transform_14, window_bounds = array<i64: 1, 32>}, {transform_indices = @transform_15, window_bounds = array<i64: 4, 32>}]} {
    %c0 = arith.constant 0 : index
    %c0_0 = arith.constant 0 : index
    %c0_1 = arith.constant 0 : index
    %0 = vector.load %arg1[%c0, %c0_0, %c0_1] : memref<4x8x32xf32, #tpu.memory_space<vmem>>, vector<4x8x32xf32>
    %1 = vector.shape_cast %0 : vector<4x8x32xf32> to vector<32x32xf32>
    %c0_2 = arith.constant 0 : index
    %c0_3 = arith.constant 0 : index
    %2 = vector.load %arg3[%c0_2, %c0_3] : memref<32x32xf32, #tpu.memory_space<vmem>>, vector<32x32xf32>
    %cst = arith.constant dense<0.000000e+00> : vector<32x32xf32>
    %3 = tpu.matmul %1, %2, %cst {dimension_numbers = #tpu.dot_dimension_numbers<[1], [0], [0], [1], [0, 0, 1, 1], [], []>, precision = #tpu.contract_precision<fp32>} : vector<32x32xf32>, vector<32x32xf32>, vector<32x32xf32> -> vector<32x32xf32>
    %c0_4 = arith.constant 0 : index
    %c0_5 = arith.constant 0 : index
    %4 = vector.load %arg4[%c0_4, %c0_5] : memref<1x32xf32, #tpu.memory_space<vmem>>, vector<1x32xf32>
    %5 = vector.broadcast %4 : vector<1x32xf32> to vector<32x32xf32>
    %6 = arith.addf %3, %5 : vector<32x32xf32>
    %7 = math.tanh %6 : vector<32x32xf32>
    %c0_6 = arith.constant 0 : index
    %c0_7 = arith.constant 0 : index
    %8 = vector.load %arg5[%c0_6, %c0_7] : memref<32x8xf32, #tpu.memory_space<vmem>>, vector<32x8xf32>
    %cst_8 = arith.constant dense<0.000000e+00> : vector<32x8xf32>
    %9 = tpu.matmul %7, %8, %cst_8 {dimension_numbers = #tpu.dot_dimension_numbers<[1], [0], [0], [1], [0, 0, 1, 1], [], []>, precision = #tpu.contract_precision<fp32>} : vector<32x32xf32>, vector<32x8xf32>, vector<32x8xf32> -> vector<32x8xf32>
    %c0_9 = arith.constant 0 : index
    %c0_10 = arith.constant 0 : index
    %10 = vector.load %arg6[%c0_9, %c0_10] : memref<1x8xf32, #tpu.memory_space<vmem>>, vector<1x8xf32>
    %11 = vector.broadcast %10 : vector<1x8xf32> to vector<32x8xf32>
    %12 = arith.addf %9, %11 : vector<32x8xf32>
    %13 = math.tanh %12 : vector<32x8xf32>
    %14 = vector.shape_cast %13 : vector<32x8xf32> to vector<4x8x8xf32>
    %cst_11 = arith.constant dense<0xFF800000> : vector<4x8xf32>
    %15 = vector.multi_reduction <maximumf>, %14, %cst_11 [1] : vector<4x8x8xf32> to vector<4x8xf32>
    %16 = vector.shape_cast %15 : vector<4x8xf32> to vector<4x1x8xf32>
    %17 = vector.broadcast %16 : vector<4x1x8xf32> to vector<4x8x8xf32>
    %18 = arith.subf %14, %17 : vector<4x8x8xf32>
    %19 = math.exp %18 : vector<4x8x8xf32>
    %cst_12 = arith.constant dense<0.000000e+00> : vector<4x8xf32>
    %20 = vector.multi_reduction <add>, %19, %cst_12 [1] : vector<4x8x8xf32> to vector<4x8xf32>
    %21 = vector.shape_cast %20 : vector<4x8xf32> to vector<4x1x8xf32>
    %22 = vector.broadcast %21 : vector<4x1x8xf32> to vector<4x8x8xf32>
    %23 = arith.divf %19, %22 : vector<4x8x8xf32>
    %c0_13 = arith.constant 0 : index
    %c0_14 = arith.constant 0 : index
    %24 = vector.load %arg7[%c0_13, %c0_14] : memref<1x8xf32, #tpu.memory_space<vmem>>, vector<1x8xf32>
    %25 = vector.shape_cast %24 : vector<1x8xf32> to vector<1x1x8xf32>
    %26 = vector.broadcast %25 : vector<1x1x8xf32> to vector<4x8x8xf32>
    %27 = arith.mulf %23, %26 : vector<4x8x8xf32>
    %cst_15 = arith.constant dense<0.000000e+00> : vector<4x8xf32>
    %28 = vector.multi_reduction <add>, %27, %cst_15 [2] : vector<4x8x8xf32> to vector<4x8xf32>
    %29 = vector.shape_cast %28 : vector<4x8xf32> to vector<4x8x1xf32>
    %30 = vector.broadcast %29 : vector<4x8x1xf32> to vector<4x8x32xf32>
    %31 = arith.mulf %30, %0 : vector<4x8x32xf32>
    %cst_16 = arith.constant dense<0.000000e+00> : vector<4x32xf32>
    %32 = vector.multi_reduction <add>, %31, %cst_16 [1] : vector<4x8x32xf32> to vector<4x32xf32>
    %c0_17 = arith.constant 0 : index
    %c0_18 = arith.constant 0 : index
    %33 = vector.load %arg8[%c0_17, %c0_18] : memref<1x1xf32, #tpu.memory_space<vmem>>, vector<1x1xf32>
    %34 = vector.broadcast %33 : vector<1x1xf32> to vector<4x32xf32>
    %35 = arith.addf %32, %34 : vector<4x32xf32>
    %36 = math.tanh %35 : vector<4x32xf32>
    %c0_19 = arith.constant 0 : index
    %c0_20 = arith.constant 0 : index
    %37 = vector.load %arg2[%c0_19, %c0_20] : memref<4x32xf32, #tpu.memory_space<vmem>>, vector<4x32xf32>
    %c0_21 = arith.constant 0 : index
    %c0_22 = arith.constant 0 : index
    %38 = vector.load %arg9[%c0_21, %c0_22] : memref<32x24xf32, #tpu.memory_space<vmem>>, vector<32x24xf32>
    %cst_23 = arith.constant dense<0.000000e+00> : vector<4x24xf32>
    %39 = tpu.matmul %37, %38, %cst_23 {dimension_numbers = #tpu.dot_dimension_numbers<[1], [0], [0], [1], [0, 0, 1, 1], [], []>, precision = #tpu.contract_precision<fp32>} : vector<4x32xf32>, vector<32x24xf32>, vector<4x24xf32> -> vector<4x24xf32>
    %c0_24 = arith.constant 0 : index
    %c0_25 = arith.constant 0 : index
    %40 = vector.load %arg10[%c0_24, %c0_25] : memref<1x24xf32, #tpu.memory_space<vmem>>, vector<1x24xf32>
    %41 = vector.broadcast %40 : vector<1x24xf32> to vector<4x24xf32>
    %42 = arith.addf %39, %41 : vector<4x24xf32>
    %43 = math.tanh %42 : vector<4x24xf32>
    %c0_26 = arith.constant 0 : index
    %c0_27 = arith.constant 0 : index
    %44 = vector.load %arg11[%c0_26, %c0_27] : memref<24x32xf32, #tpu.memory_space<vmem>>, vector<24x32xf32>
    %cst_28 = arith.constant dense<0.000000e+00> : vector<4x32xf32>
    %45 = tpu.matmul %43, %44, %cst_28 {dimension_numbers = #tpu.dot_dimension_numbers<[1], [0], [0], [1], [0, 0, 1, 1], [], []>, precision = #tpu.contract_precision<fp32>} : vector<4x24xf32>, vector<24x32xf32>, vector<4x32xf32> -> vector<4x32xf32>
    %c0_29 = arith.constant 0 : index
    %c0_30 = arith.constant 0 : index
    %46 = vector.load %arg12[%c0_29, %c0_30] : memref<1x32xf32, #tpu.memory_space<vmem>>, vector<1x32xf32>
    %47 = vector.broadcast %46 : vector<1x32xf32> to vector<4x32xf32>
    %48 = arith.addf %45, %47 : vector<4x32xf32>
    %49 = math.tanh %48 : vector<4x32xf32>
    %c0_31 = arith.constant 0 : index
    %c0_32 = arith.constant 0 : index
    %50 = vector.load %arg13[%c0_31, %c0_32] : memref<32x32xf32, #tpu.memory_space<vmem>>, vector<32x32xf32>
    %cst_33 = arith.constant dense<0.000000e+00> : vector<4x32xf32>
    %51 = tpu.matmul %49, %50, %cst_33 {dimension_numbers = #tpu.dot_dimension_numbers<[1], [0], [0], [1], [0, 0, 1, 1], [], []>, precision = #tpu.contract_precision<fp32>} : vector<4x32xf32>, vector<32x32xf32>, vector<4x32xf32> -> vector<4x32xf32>
    %c0_34 = arith.constant 0 : index
    %c0_35 = arith.constant 0 : index
    %52 = vector.load %arg14[%c0_34, %c0_35] : memref<32x32xf32, #tpu.memory_space<vmem>>, vector<32x32xf32>
    %cst_36 = arith.constant dense<0.000000e+00> : vector<4x32xf32>
    %53 = tpu.matmul %36, %52, %cst_36 {dimension_numbers = #tpu.dot_dimension_numbers<[1], [0], [0], [1], [0, 0, 1, 1], [], []>, precision = #tpu.contract_precision<fp32>} : vector<4x32xf32>, vector<32x32xf32>, vector<4x32xf32> -> vector<4x32xf32>
    %54 = arith.addf %51, %53 : vector<4x32xf32>
    %c0_37 = arith.constant 0 : index
    %c0_38 = arith.constant 0 : index
    %55 = vector.load %arg15[%c0_37, %c0_38] : memref<1x32xf32, #tpu.memory_space<vmem>>, vector<1x32xf32>
    %56 = vector.broadcast %55 : vector<1x32xf32> to vector<4x32xf32>
    %57 = arith.addf %54, %56 : vector<4x32xf32>
    %58 = arith.negf %57 : vector<4x32xf32>
    %59 = math.exp %58 : vector<4x32xf32>
    %cst_39 = arith.constant 1.000000e+00 : f32
    %60 = vector.broadcast %cst_39 : f32 to vector<4x32xf32>
    %61 = arith.addf %60, %59 : vector<4x32xf32>
    %62 = arith.divf %60, %61 : vector<4x32xf32>
    %63 = arith.mulf %62, %49 : vector<4x32xf32>
    %cst_40 = arith.constant 1.000000e+00 : f32
    %64 = vector.broadcast %cst_40 : f32 to vector<4x32xf32>
    %65 = arith.subf %64, %62 : vector<4x32xf32>
    %66 = arith.mulf %65, %36 : vector<4x32xf32>
    %67 = arith.addf %63, %66 : vector<4x32xf32>
    %c0_41 = arith.constant 0 : index
    %c0_42 = arith.constant 0 : index
    %68 = vector.load %arg16[%c0_41, %c0_42] : memref<4x32xf32, #tpu.memory_space<vmem>>, vector<4x32xf32>
    tpu.vector_store %arg16[%c0_41, %c0_42], %67 {strides = array<i32>} : memref<4x32xf32, #tpu.memory_space<vmem>>, vector<4x32xf32>,
    return
  }
  func.func @transform_0(%arg0: i32) -> (i32, i32, i32) {
    %c0_i32 = arith.constant 0 : i32
    %c0_i32_0 = arith.constant 0 : i32
    %c0_i32_1 = arith.constant 0 : i32
    return %arg0, %c0_i32, %c0_i32_0 : i32, i32, i32
  }
  func.func @transform_1(%arg0: i32) -> (i32, i32) {
    %c0_i32 = arith.constant 0 : i32
    %c0_i32_0 = arith.constant 0 : i32
    return %arg0, %c0_i32 : i32, i32
  }
  func.func @transform_2(%arg0: i32) -> (i32, i32) {
    %c0_i32 = arith.constant 0 : i32
    %c0_i32_0 = arith.constant 0 : i32
    %c0_i32_1 = arith.constant 0 : i32
    return %c0_i32, %c0_i32_0 : i32, i32
  }
  func.func @transform_3(%arg0: i32) -> (i32, i32) {
    %c0_i32 = arith.constant 0 : i32
    %c0_i32_0 = arith.constant 0 : i32
    %c0_i32_1 = arith.constant 0 : i32
    return %c0_i32, %c0_i32_0 : i32, i32
  }
  func.func @transform_4(%arg0: i32) -> (i32, i32) {
    %c0_i32 = arith.constant 0 : i32
    %c0_i32_0 = arith.constant 0 : i32
    %c0_i32_1 = arith.constant 0 : i32
    return %c0_i32, %c0_i32_0 : i32, i32
  }
  func.func @transform_5(%arg0: i32) -> (i32, i32) {
    %c0_i32 = arith.constant 0 : i32
    %c0_i32_0 = arith.constant 0 : i32
    %c0_i32_1 = arith.constant 0 : i32
    return %c0_i32, %c0_i32_0 : i32, i32
  }
  func.func @transform_6(%arg0: i32) -> (i32, i32) {
    %c0_i32 = arith.constant 0 : i32
    %c0_i32_0 = arith.constant 0 : i32
    %c0_i32_1 = arith.constant 0 : i32
    return %c0_i32, %c0_i32_0 : i32, i32
  }
  func.func @transform_7(%arg0: i32) -> (i32, i32) {
    %c0_i32 = arith.constant 0 : i32
    %c0_i32_0 = arith.constant 0 : i32
    %c0_i32_1 = arith.constant 0 : i32
    return %c0_i32, %c0_i32_0 : i32, i32
  }
  func.func @transform_8(%arg0: i32) -> (i32, i32) {
    %c0_i32 = arith.constant 0 : i32
    %c0_i32_0 = arith.constant 0 : i32
    %c0_i32_1 = arith.constant 0 : i32
    return %c0_i32, %c0_i32_0 : i32, i32
  }
  func.func @transform_9(%arg0: i32) -> (i32, i32) {
    %c0_i32 = arith.constant 0 : i32
    %c0_i32_0 = arith.constant 0 : i32
    %c0_i32_1 = arith.constant 0 : i32
    return %c0_i32, %c0_i32_0 : i32, i32
  }
  func.func @transform_10(%arg0: i32) -> (i32, i32) {
    %c0_i32 = arith.constant 0 : i32
    %c0_i32_0 = arith.constant 0 : i32
    %c0_i32_1 = arith.constant 0 : i32
    return %c0_i32, %c0_i32_0 : i32, i32
  }
  func.func @transform_11(%arg0: i32) -> (i32, i32) {
    %c0_i32 = arith.constant 0 : i32
    %c0_i32_0 = arith.constant 0 : i32
    %c0_i32_1 = arith.constant 0 : i32
    return %c0_i32, %c0_i32_0 : i32, i32
  }
  func.func @transform_12(%arg0: i32) -> (i32, i32) {
    %c0_i32 = arith.constant 0 : i32
    %c0_i32_0 = arith.constant 0 : i32
    %c0_i32_1 = arith.constant 0 : i32
    return %c0_i32, %c0_i32_0 : i32, i32
  }
  func.func @transform_13(%arg0: i32) -> (i32, i32) {
    %c0_i32 = arith.constant 0 : i32
    %c0_i32_0 = arith.constant 0 : i32
    %c0_i32_1 = arith.constant 0 : i32
    return %c0_i32, %c0_i32_0 : i32, i32
  }
  func.func @transform_14(%arg0: i32) -> (i32, i32) {
    %c0_i32 = arith.constant 0 : i32
    %c0_i32_0 = arith.constant 0 : i32
    %c0_i32_1 = arith.constant 0 : i32
    return %c0_i32, %c0_i32_0 : i32, i32
  }
  func.func @transform_15(%arg0: i32) -> (i32, i32) {
    %c0_i32 = arith.constant 0 : i32
    %c0_i32_0 = arith.constant 0 : i32
    return %arg0, %c0_i32 : i32, i32
  }
}

</mosaic_0001>

<llo_original>
// kernel: tpu_custom_call.1
$region0: #{tpu_custom_call.1}
  #allocation0 [shape = 'u32[]', space=smem, size = 0x4, offset = 0x4, fixed_abs, tag = 'smem constant byte address 0x4 - core index']
  #allocation1 [shape = 'u32[72,128]{1,0:T(1,128)}', space=vmem, size = 0x9000, scoped, tag = 'internal scratch']
  #allocation2 [shape = 'f32[1,1]{1,0:T(1,128)S(1)}', space=vmem, size = 0x200, scoped, tag = 'scoped memory for tpu_custom_call.1']
  %s0 = inlined_call_operand.vmem [shape: f32[4,8,32], index: 0, kind: input, shape index: {}]
  %s1 = inlined_call_operand.vmem [shape: f32[4,32], index: 1, kind: input, shape index: {}]
  %s2 = inlined_call_operand.vmem [shape: f32[32,32], index: 2, kind: input, shape index: {}]
  %s3 = inlined_call_operand.vmem [shape: f32[1,32], index: 3, kind: input, shape index: {}]
  %s4 = inlined_call_operand.vmem [shape: f32[32,8], index: 4, kind: input, shape index: {}]
  %s5 = inlined_call_operand.vmem [shape: f32[1,8], index: 5, kind: input, shape index: {}]
  %s6 = inlined_call_operand.vmem [shape: f32[1,8], index: 6, kind: input, shape index: {}]
  %s7 = inlined_call_operand.<no memory space> [shape: f32[1,1], index: 7, kind: input, shape index: {}]
  %s8 = inlined_call_operand.vmem [shape: f32[32,24], index: 8, kind: input, shape index: {}]
  %s9 = inlined_call_operand.vmem [shape: f32[1,24], index: 9, kind: input, shape index: {}]
  %s10 = inlined_call_operand.hbm [shape: f32[24,32], index: 10, kind: input, shape index: {}]
  %s11 = inlined_call_operand.vmem [shape: f32[1,32], index: 11, kind: input, shape index: {}]
  %s12 = inlined_call_operand.hbm [shape: f32[32,32], index: 12, kind: input, shape index: {}]
  %s13 = inlined_call_operand.hbm [shape: f32[32,32], index: 13, kind: input, shape index: {}]
  %s14 = inlined_call_operand.vmem [shape: f32[1,32], index: 14, kind: input, shape index: {}]
  %s15 = inlined_call_operand.hbm [shape: f32[4,32], index: 15, kind: output, shape index: {}]
  %s16 = sld [smem:[#allocation0]]
  $region82: #{tpu_custom_call.1} parent=0
    _
  %s18 = ssub.s32 1, %s16
  %s19 = scalar_select 0, %s18, %s16
  %v20 = vstv %s7
  %21 = vst [vmem:[#allocation2] sm:$0x1] %v20
  $region1: #{tpu_custom_call.1} parent=0
    #allocation3 [shape = 'u8[12288]{0}', space=vmem, size = 0x3000, scoped, tag = 'input window, operand 10, single buffered']
    #allocation4 [shape = 's32[1]{0}', space=sflag, size = 0x4, scoped, tag = 'scoped memory for tpu_custom_call.1']
    #allocation5 [shape = 's32[1]{0}', space=sflag, size = 0x4, scoped, tag = 'scoped memory for tpu_custom_call.1']
    #allocation6 [shape = 'u8[16384]{0}', space=vmem, size = 0x4000, scoped, tag = 'input window, operand 12, single buffered']
    #allocation7 [shape = 's32[1]{0}', space=sflag, size = 0x4, scoped, tag = 'scoped memory for tpu_custom_call.1']
    #allocation8 [shape = 'u8[16384]{0}', space=vmem, size = 0x4000, scoped, tag = 'input window, operand 13, single buffered']
    #allocation9 [shape = 'u8[2048]{0}', space=vmem, size = 0x800, scoped, tag = 'output window, operand 0, single buffered']
    %22 = vsyncpa [#allocation4], 0
    %23 = vsyncpa [#allocation7], 0
    %24 = vsyncpa [#allocation5], 0
    // Predicated region
    $region2: #{tpu_custom_call.1} parent=1 // pred_check
      _
    $region3: #{tpu_custom_call.1} parent=1 // pred_check_branch
      %26 = sbr.rel (0) target = $region5
    $region4: #{tpu_custom_call.1} parent=1 // pred_region
      _
    $region5: #{tpu_custom_call.1} parent=1 // pred_fallthru
      _
    // Predicated region
    $region6: #{tpu_custom_call.1} parent=1 // pred_check
      _
    $region7: #{tpu_custom_call.1} parent=1 // pred_check_branch
      %28 = sbr.rel (0) target = $region9
    $region8: #{tpu_custom_call.1} parent=1 // pred_region
      _
    $region9: #{tpu_custom_call.1} parent=1 // pred_fallthru
      _
    // Predicated region
    $region10: #{tpu_custom_call.1} parent=1 // pred_check
      _
    $region11: #{tpu_custom_call.1} parent=1 // pred_check_branch
      %30 = sbr.rel (0) target = $region13
    $region12: #{tpu_custom_call.1} parent=1 // pred_region
      _
    $region13: #{tpu_custom_call.1} parent=1 // pred_fallthru
      _
    // Predicated region
    $region14: #{tpu_custom_call.1} parent=1 // pred_check
      _
    $region15: #{tpu_custom_call.1} parent=1 // pred_check_branch
      %32 = sbr.rel (0) target = $region17
    $region16: #{tpu_custom_call.1} parent=1 // pred_region
      _
    $region17: #{tpu_custom_call.1} parent=1 // pred_fallthru
      _
    // Predicated region
    $region18: #{tpu_custom_call.1} parent=1 // pred_check
      _
    $region19: #{tpu_custom_call.1} parent=1 // pred_check_branch
      %34 = sbr.rel (0) target = $region21
    $region20: #{tpu_custom_call.1} parent=1 // pred_region
      _
    $region21: #{tpu_custom_call.1} parent=1 // pred_fallthru
      _
    // Predicated region
    $region22: #{tpu_custom_call.1} parent=1 // pred_check
      _
    $region23: #{tpu_custom_call.1} parent=1 // pred_check_branch
      %36 = sbr.rel (0) target = $region25
    $region24: #{tpu_custom_call.1} parent=1 // pred_region
      _
    $region25: #{tpu_custom_call.1} parent=1 // pred_fallthru
      _
    // Predicated region
    $region26: #{tpu_custom_call.1} parent=1 // pred_check
      _
    $region27: #{tpu_custom_call.1} parent=1 // pred_check_branch
      %38 = sbr.rel (0) target = $region29
    $region28: #{tpu_custom_call.1} parent=1 // pred_region
      _
    $region29: #{tpu_custom_call.1} parent=1 // pred_fallthru
      _
    // Predicated region
    $region30: #{tpu_custom_call.1} parent=1 // pred_check
      _
    $region31: #{tpu_custom_call.1} parent=1 // pred_check_branch
      %40 = sbr.rel (0) target = $region33
    $region32: #{tpu_custom_call.1} parent=1 // pred_region
      _
    $region33: #{tpu_custom_call.1} parent=1 // pred_fallthru
      _
    // Predicated region
    $region34: #{tpu_custom_call.1} parent=1 // pred_check
      _
    $region35: #{tpu_custom_call.1} parent=1 // pred_check_branch
      %42 = sbr.rel (0) target = $region37
    $region36: #{tpu_custom_call.1} parent=1 // pred_region
      _
    $region37: #{tpu_custom_call.1} parent=1 // pred_fallthru
      _
    // Predicated region
    $region38: #{tpu_custom_call.1} parent=1 // pred_check
      _
    $region39: #{tpu_custom_call.1} parent=1 // pred_check_branch
      %44 = sbr.rel (0) target = $region41
    $region40: #{tpu_custom_call.1} parent=1 // pred_region
      _
    $region41: #{tpu_custom_call.1} parent=1 // pred_fallthru
      _
    // Predicated region
    $region42: #{tpu_custom_call.1} parent=1 // pred_check
      _
    $region43: #{tpu_custom_call.1} parent=1 // pred_check_branch
      %46 = sbr.rel (0) target = $region45
    $region44: #{tpu_custom_call.1} parent=1 // pred_region
      %48 = vsyncadd [#allocation4], 0
      %s49 = sshll.u32 %s10, 4
      %s50 = int_to_ptr.hbm [resolvable:$true] %s49
      %s51 = sshll.u32 [#allocation3], 4
      %s52 = int_to_ptr.vmem [resolvable:$true] %s51
      %57 = dma.hbm_to_vmem [thread:$0]  %s50, 384, %s52, [#allocation4], 128, 128, 8
    $region45: #{tpu_custom_call.1} parent=1 // pred_fallthru
      _
    // Predicated region
    $region46: #{tpu_custom_call.1} parent=1 // pred_check
      _
    $region47: #{tpu_custom_call.1} parent=1 // pred_check_branch
      %59 = sbr.rel (0) target = $region49
    $region48: #{tpu_custom_call.1} parent=1 // pred_region
      _
    $region49: #{tpu_custom_call.1} parent=1 // pred_fallthru
      _
    // Predicated region
    $region50: #{tpu_custom_call.1} parent=1 // pred_check
      _
    $region51: #{tpu_custom_call.1} parent=1 // pred_check_branch
      %61 = sbr.rel (0) target = $region53
    $region52: #{tpu_custom_call.1} parent=1 // pred_region
      %63 = vsyncadd [#allocation7], 0
      %s64 = sshll.u32 %s12, 4
      %s65 = int_to_ptr.hbm [resolvable:$true] %s64
      %s66 = sshll.u32 [#allocation6], 4
      %s67 = int_to_ptr.vmem [resolvable:$true] %s66
      %72 = dma.hbm_to_vmem [thread:$0]  %s65, 512, %s67, [#allocation7], 128, 128, 8
    $region53: #{tpu_custom_call.1} parent=1 // pred_fallthru
      _
    // Predicated region
    $region54: #{tpu_custom_call.1} parent=1 // pred_check
      _
    $region55: #{tpu_custom_call.1} parent=1 // pred_check_branch
      %74 = sbr.rel (0) target = $region57
    $region56: #{tpu_custom_call.1} parent=1 // pred_region
      %76 = vsyncadd [#allocation7], 0
      %s77 = sshll.u32 %s13, 4
      %s78 = int_to_ptr.hbm [resolvable:$true] %s77
      %s79 = sshll.u32 [#allocation8], 4
      %s80 = int_to_ptr.vmem [resolvable:$true] %s79
      %85 = dma.hbm_to_vmem [thread:$0]  %s78, 512, %s80, [#allocation7], 128, 128, 8
    $region57: #{tpu_custom_call.1} parent=1 // pred_fallthru
      _
    // Predicated region
    $region58: #{tpu_custom_call.1} parent=1 // pred_check
      _
    $region59: #{tpu_custom_call.1} parent=1 // pred_check_branch
      %87 = sbr.rel (0) target = $region61
    $region60: #{tpu_custom_call.1} parent=1 // pred_region
      _
    $region61: #{tpu_custom_call.1} parent=1 // pred_fallthru
      _
    // Predicated region
    $region62: #{tpu_custom_call.1} parent=1 // pred_check
      _
    $region63: #{tpu_custom_call.1} parent=1 // pred_check_branch
      %89 = sbr.rel (0) target = $region65
    $region64: #{tpu_custom_call.1} parent=1 // pred_region
      %91 = dma.done [#allocation4], 384
    $region65: #{tpu_custom_call.1} parent=1 // pred_fallthru
      _
    // Predicated region
    $region66: #{tpu_custom_call.1} parent=1 // pred_check
      _
    $region67: #{tpu_custom_call.1} parent=1 // pred_check_branch
      %93 = sbr.rel (0) target = $region69
    $region68: #{tpu_custom_call.1} parent=1 // pred_region
      %95 = dma.done [#allocation7], 512
    $region69: #{tpu_custom_call.1} parent=1 // pred_fallthru
      _
    // Predicated region
    $region70: #{tpu_custom_call.1} parent=1 // pred_check
      _
    $region71: #{tpu_custom_call.1} parent=1 // pred_check_branch
      %97 = sbr.rel (0) target = $region73
    $region72: #{tpu_custom_call.1} parent=1 // pred_region
      %99 = dma.done [#allocation7], 512
    $region73: #{tpu_custom_call.1} parent=1 // pred_fallthru
      _
    %v100 = vld [vmem:[%s0] sm:$0xff]
    %v101 = vld [vmem:[%s0 + $0x8] sm:$0xff]
    %v102 = vld [vmem:[%s0 + $0x10] sm:$0xff]
    %v103 = vld [vmem:[%s0 + $0x18] sm:$0xff]
    %v104 = vld [vmem:[%s2] sm:$0xff]
    %v105 = vld [vmem:[%s2 + $0x8] sm:$0xff]
    %v106 = vld [vmem:[%s2 + $0x10] sm:$0xff]
    %v107 = vld [vmem:[%s2 + $0x18] sm:$0xff]
    %v108 = vld [vmem:[%s3] sm:$0x1]
    %v110 = vperm.slane %v108, 0
    %vm112 = vcmask 261120
    %v114 = vsel %vm112, %v100, 0
    %v117 = vsel %vm112, %v101, 0
    %v120 = vsel %vm112, %v102, 0
    %v123 = vsel %vm112, %v103, 0
    %125 = vmatpush.msra.mxu0 0.0
    %126 = vmatpush.msra.mxu0 0.0
    %127 = vmatpush.msra.mxu0 0.0
    %128 = vmatpush.msra.mxu0 0.0
    %129 = vmatpush.msra.mxu0 0.0
    %130 = vmatpush.msra.mxu0 0.0
    %131 = vmatpush.msra.mxu0 0.0
    %132 = vmatpush.msra.mxu0 0.0
    %133 = vmatpush.msra.mxu0 0.0
    %134 = vmatpush.msra.mxu0 0.0
    %135 = vmatpush.msra.mxu0 0.0
    %136 = vmatpush.msra.mxu0 0.0
    %v137 = vand.u32 %v107, 4294901760
    %138 = vmatpush.msra.mxu0 %v137
    %v139 = vand.u32 %v106, 4294901760
    %140 = vmatpush.msra.mxu0 %v139
    %v141 = vand.u32 %v105, 4294901760
    %142 = vmatpush.msra.mxu0 %v141
    %v143 = vand.u32 %v104, 4294901760
    %144 = vmatpush.msra.mxu0 %v143
    %v145 = vand.u32 %v114, 4294901760
    %v146 = vsub.f32 %v114, %v145
    %v147 = vand.u32 %v146, 4294901760
    %v148 = vsub.f32 %v146, %v147
    %v149 = vand.u32 %v148, 4294901760
    %150 = vmatmul.f32.gmra.mxu0 %v149
    %v151 = vpop.f32.mrf.mxu0
    %v152 = vadd.f32 %v110, %v151
    %v153 = vand.u32 %v117, 4294901760
    %v154 = vsub.f32 %v117, %v153
    %v155 = vand.u32 %v154, 4294901760
    %v156 = vsub.f32 %v154, %v155
    %v157 = vand.u32 %v156, 4294901760
    %158 = vmatmul.f32.gmra.mxu0 %v157
    %v159 = vpop.f32.mrf.mxu0
    %v160 = vadd.f32 %v110, %v159
    %v161 = vand.u32 %v120, 4294901760
    %v162 = vsub.f32 %v120, %v161
    %v163 = vand.u32 %v162, 4294901760
    %v164 = vsub.f32 %v162, %v163
    %v165 = vand.u32 %v164, 4294901760
    %166 = vmatmul.f32.gmra.mxu0 %v165
    %v167 = vpop.f32.mrf.mxu0
    %v168 = vadd.f32 %v110, %v167
    %v169 = vand.u32 %v123, 4294901760
    %v170 = vsub.f32 %v123, %v169
    %v171 = vand.u32 %v170, 4294901760
    %v172 = vsub.f32 %v170, %v171
    %v173 = vand.u32 %v172, 4294901760
    %174 = vmatmul.f32.gmra.mxu0 %v173
    %v175 = vpop.f32.mrf.mxu0
    %v176 = vadd.f32 %v110, %v175
    %177 = vdwg.mxu0
    %178 = vmatpush.msra.mxu0 0.0
    %179 = vmatpush.msra.mxu0 0.0
    %180 = vmatpush.msra.mxu0 0.0
    %181 = vmatpush.msra.mxu0 0.0
    %182 = vmatpush.msra.mxu0 0.0
    %183 = vmatpush.msra.mxu0 0.0
    %184 = vmatpush.msra.mxu0 0.0
    %185 = vmatpush.msra.mxu0 0.0
    %186 = vmatpush.msra.mxu0 0.0
    %187 = vmatpush.msra.mxu0 0.0
    %188 = vmatpush.msra.mxu0 0.0
    %189 = vmatpush.msra.mxu0 0.0
    %v190 = vand.u32 %v107, 4294901760
    %v191 = vsub.f32 %v107, %v190
    %v192 = vand.u32 %v191, 4294901760
    %v193 = vsub.f32 %v191, %v192
    %v194 = vand.u32 %v193, 4294901760
    %195 = vmatpush.msra.mxu0 %v194
    %v196 = vand.u32 %v106, 4294901760
    %v197 = vsub.f32 %v106, %v196
    %v198 = vand.u32 %v197, 4294901760
    %v199 = vsub.f32 %v197, %v198
    %v200 = vand.u32 %v199, 4294901760
    %201 = vmatpush.msra.mxu0 %v200
    %v202 = vand.u32 %v105, 4294901760
    %v203 = vsub.f32 %v105, %v202
    %v204 = vand.u32 %v203, 4294901760
    %v205 = vsub.f32 %v203, %v204
    %v206 = vand.u32 %v205, 4294901760
    %207 = vmatpush.msra.mxu0 %v206
    %v208 = vand.u32 %v104, 4294901760
    %v209 = vsub.f32 %v104, %v208
    %v210 = vand.u32 %v209, 4294901760
    %v211 = vsub.f32 %v209, %v210
    %v212 = vand.u32 %v211, 4294901760
    %213 = vmatpush.msra.mxu0 %v212
    %v214 = vand.u32 %v114, 4294901760
    %215 = vmatmul.f32.gmra.mxu0 %v214
    %v216 = vpop.f32.mrf.mxu0
    %v217 = vadd.f32 %v152, %v216
    %v218 = vand.u32 %v117, 4294901760
    %219 = vmatmul.f32.gmra.mxu0 %v218
    %v220 = vpop.f32.mrf.mxu0
    %v221 = vadd.f32 %v160, %v220
    %v222 = vand.u32 %v120, 4294901760
    %223 = vmatmul.f32.gmra.mxu0 %v222
    %v224 = vpop.f32.mrf.mxu0
    %v225 = vadd.f32 %v168, %v224
    %v226 = vand.u32 %v123, 4294901760
    %227 = vmatmul.f32.gmra.mxu0 %v226
    %v228 = vpop.f32.mrf.mxu0
    %v229 = vadd.f32 %v176, %v228
    %230 = vdwg.mxu0
    %231 = vmatpush.msra.mxu0 0.0
    %232 = vmatpush.msra.mxu0 0.0
    %233 = vmatpush.msra.mxu0 0.0
    %234 = vmatpush.msra.mxu0 0.0
    %235 = vmatpush.msra.mxu0 0.0
    %236 = vmatpush.msra.mxu0 0.0
    %237 = vmatpush.msra.mxu0 0.0
    %238 = vmatpush.msra.mxu0 0.0
    %239 = vmatpush.msra.mxu0 0.0
    %240 = vmatpush.msra.mxu0 0.0
    %241 = vmatpush.msra.mxu0 0.0
    %242 = vmatpush.msra.mxu0 0.0
    %v243 = vand.u32 %v107, 4294901760
    %v244 = vsub.f32 %v107, %v243
    %245 = vmatpush.msra.mxu0 %v244
    %v246 = vand.u32 %v106, 4294901760
    %v247 = vsub.f32 %v106, %v246
    %248 = vmatpush.msra.mxu0 %v247
    %v249 = vand.u32 %v105, 4294901760
    %v250 = vsub.f32 %v105, %v249
    %251 = vmatpush.msra.mxu0 %v250
    %v252 = vand.u32 %v104, 4294901760
    %v253 = vsub.f32 %v104, %v252
    %254 = vmatpush.msra.mxu0 %v253
    %v255 = vand.u32 %v114, 4294901760
    %v256 = vsub.f32 %v114, %v255
    %257 = vmatmul.f32.gmra.mxu0 %v256
    %v258 = vpop.f32.mrf.mxu0
    %v259 = vadd.f32 %v217, %v258
    %v260 = vand.u32 %v117, 4294901760
    %v261 = vsub.f32 %v117, %v260
    %262 = vmatmul.f32.gmra.mxu0 %v261
    %v263 = vpop.f32.mrf.mxu0
    %v264 = vadd.f32 %v221, %v263
    %v265 = vand.u32 %v120, 4294901760
    %v266 = vsub.f32 %v120, %v265
    %267 = vmatmul.f32.gmra.mxu0 %v266
    %v268 = vpop.f32.mrf.mxu0
    %v269 = vadd.f32 %v225, %v268
    %v270 = vand.u32 %v123, 4294901760
    %v271 = vsub.f32 %v123, %v270
    %272 = vmatmul.f32.gmra.mxu0 %v271
    %v273 = vpop.f32.mrf.mxu0
    %v274 = vadd.f32 %v229, %v273
    %275 = vdwg.mxu0
    %276 = vmatpush.msra.mxu0 0.0
    %277 = vmatpush.msra.mxu0 0.0
    %278 = vmatpush.msra.mxu0 0.0
    %279 = vmatpush.msra.mxu0 0.0
    %280 = vmatpush.msra.mxu0 0.0
    %281 = vmatpush.msra.mxu0 0.0
    %282 = vmatpush.msra.mxu0 0.0
    %283 = vmatpush.msra.mxu0 0.0
    %284 = vmatpush.msra.mxu0 0.0
    %285 = vmatpush.msra.mxu0 0.0
    %286 = vmatpush.msra.mxu0 0.0
    %287 = vmatpush.msra.mxu0 0.0
    %v288 = vand.u32 %v107, 4294901760
    %289 = vmatpush.msra.mxu0 %v288
    %v290 = vand.u32 %v106, 4294901760
    %291 = vmatpush.msra.mxu0 %v290
    %v292 = vand.u32 %v105, 4294901760
    %293 = vmatpush.msra.mxu0 %v292
    %v294 = vand.u32 %v104, 4294901760
    %295 = vmatpush.msra.mxu0 %v294
    %v296 = vand.u32 %v114, 4294901760
    %v297 = vsub.f32 %v114, %v296
    %v298 = vand.u32 %v297, 4294901760
    %299 = vmatmul.f32.gmra.mxu0 %v298
    %v300 = vpop.f32.mrf.mxu0
    %v301 = vadd.f32 %v259, %v300
    %v302 = vand.u32 %v117, 4294901760
    %v303 = vsub.f32 %v117, %v302
    %v304 = vand.u32 %v303, 4294901760
    %305 = vmatmul.f32.gmra.mxu0 %v304
    %v306 = vpop.f32.mrf.mxu0
    %v307 = vadd.f32 %v264, %v306
    %v308 = vand.u32 %v120, 4294901760
    %v309 = vsub.f32 %v120, %v308
    %v310 = vand.u32 %v309, 4294901760
    %311 = vmatmul.f32.gmra.mxu0 %v310
    %v312 = vpop.f32.mrf.mxu0
    %v313 = vadd.f32 %v269, %v312
    %v314 = vand.u32 %v123, 4294901760
    %v315 = vsub.f32 %v123, %v314
    %v316 = vand.u32 %v315, 4294901760
    %317 = vmatmul.f32.gmra.mxu0 %v316
    %v318 = vpop.f32.mrf.mxu0
    %v319 = vadd.f32 %v274, %v318
    %320 = vdwg.mxu0
    %321 = vmatpush.msra.mxu0 0.0
    %322 = vmatpush.msra.mxu0 0.0
    %323 = vmatpush.msra.mxu0 0.0
    %324 = vmatpush.msra.mxu0 0.0
    %325 = vmatpush.msra.mxu0 0.0
    %326 = vmatpush.msra.mxu0 0.0
    %327 = vmatpush.msra.mxu0 0.0
    %328 = vmatpush.msra.mxu0 0.0
    %329 = vmatpush.msra.mxu0 0.0
    %330 = vmatpush.msra.mxu0 0.0
    %331 = vmatpush.msra.mxu0 0.0
    %332 = vmatpush.msra.mxu0 0.0
    %v333 = vand.u32 %v107, 4294901760
    %v334 = vsub.f32 %v107, %v333
    %v335 = vand.u32 %v334, 4294901760
    %336 = vmatpush.msra.mxu0 %v335
    %v337 = vand.u32 %v106, 4294901760
    %v338 = vsub.f32 %v106, %v337
    %v339 = vand.u32 %v338, 4294901760
    %340 = vmatpush.msra.mxu0 %v339
    %v341 = vand.u32 %v105, 4294901760
    %v342 = vsub.f32 %v105, %v341
    %v343 = vand.u32 %v342, 4294901760
    %344 = vmatpush.msra.mxu0 %v343
    %v345 = vand.u32 %v104, 4294901760
    %v346 = vsub.f32 %v104, %v345
    %v347 = vand.u32 %v346, 4294901760
    %348 = vmatpush.msra.mxu0 %v347
    %v349 = vand.u32 %v114, 4294901760
    %350 = vmatmul.f32.gmra.mxu0 %v349
    %v351 = vpop.f32.mrf.mxu0
    %v352 = vadd.f32 %v301, %v351
    %v353 = vand.u32 %v117, 4294901760
    %354 = vmatmul.f32.gmra.mxu0 %v353
    %v355 = vpop.f32.mrf.mxu0
    %v356 = vadd.f32 %v307, %v355
    %v357 = vand.u32 %v120, 4294901760
    %358 = vmatmul.f32.gmra.mxu0 %v357
    %v359 = vpop.f32.mrf.mxu0
    %v360 = vadd.f32 %v313, %v359
    %v361 = vand.u32 %v123, 4294901760
    %362 = vmatmul.f32.gmra.mxu0 %v361
    %v363 = vpop.f32.mrf.mxu0
    %v364 = vadd.f32 %v319, %v363
    %365 = vdwg.mxu0
    %366 = vmatpush.msra.mxu0 0.0
    %367 = vmatpush.msra.mxu0 0.0
    %368 = vmatpush.msra.mxu0 0.0
    %369 = vmatpush.msra.mxu0 0.0
    %370 = vmatpush.msra.mxu0 0.0
    %371 = vmatpush.msra.mxu0 0.0
    %372 = vmatpush.msra.mxu0 0.0
    %373 = vmatpush.msra.mxu0 0.0
    %374 = vmatpush.msra.mxu0 0.0
    %375 = vmatpush.msra.mxu0 0.0
    %376 = vmatpush.msra.mxu0 0.0
    %377 = vmatpush.msra.mxu0 0.0
    %v378 = vand.u32 %v107, 4294901760
    %379 = vmatpush.msra.mxu0 %v378
    %v380 = vand.u32 %v106, 4294901760
    %381 = vmatpush.msra.mxu0 %v380
    %v382 = vand.u32 %v105, 4294901760
    %383 = vmatpush.msra.mxu0 %v382
    %v384 = vand.u32 %v104, 4294901760
    %385 = vmatpush.msra.mxu0 %v384
    %v386 = vand.u32 %v114, 4294901760
    %387 = vmatmul.f32.gmra.mxu0 %v386
    %v388 = vpop.f32.mrf.mxu0
    %v389 = vadd.f32 %v352, %v388
    %v390 = vand.u32 %v117, 4294901760
    %391 = vmatmul.f32.gmra.mxu0 %v390
    %v392 = vpop.f32.mrf.mxu0
    %v393 = vadd.f32 %v356, %v392
    %v394 = vand.u32 %v120, 4294901760
    %395 = vmatmul.f32.gmra.mxu0 %v394
    %v396 = vpop.f32.mrf.mxu0
    %v397 = vadd.f32 %v360, %v396
    %v398 = vand.u32 %v123, 4294901760
    %399 = vmatmul.f32.gmra.mxu0 %v398
    %v400 = vpop.f32.mrf.mxu0
    %v401 = vadd.f32 %v364, %v400
    %402 = vdwg.mxu0
    %v403 = vtanh.pop %v389
    %v404 = vtanh.pop %v393
    %v405 = vtanh.pop %v397
    %v406 = vtanh.pop %v401
    %v407 = vld [vmem:[%s4] sm:$0xff]
    %v408 = vld [vmem:[%s4 + $0x8] sm:$0xff]
    %v409 = vld [vmem:[%s4 + $0x10] sm:$0xff]
    %v410 = vld [vmem:[%s4 + $0x18] sm:$0xff]
    %v411 = vld [vmem:[%s5] sm:$0x1]
    %v413 = vperm.slane %v411, 0
    %v416 = vsel %vm112, %v403, 0
    %v419 = vsel %vm112, %v404, 0
    %v422 = vsel %vm112, %v405, 0
    %v425 = vsel %vm112, %v406, 0
    %427 = vmatpush.msra.mxu0 0.0
    %428 = vmatpush.msra.mxu0 0.0
    %429 = vmatpush.msra.mxu0 0.0
    %430 = vmatpush.msra.mxu0 0.0
    %431 = vmatpush.msra.mxu0 0.0
    %432 = vmatpush.msra.mxu0 0.0
    %433 = vmatpush.msra.mxu0 0.0
    %434 = vmatpush.msra.mxu0 0.0
    %435 = vmatpush.msra.mxu0 0.0
    %436 = vmatpush.msra.mxu0 0.0
    %437 = vmatpush.msra.mxu0 0.0
    %438 = vmatpush.msra.mxu0 0.0
    %v439 = vand.u32 %v410, 4294901760
    %440 = vmatpush.msra.mxu0 %v439
    %v441 = vand.u32 %v409, 4294901760
    %442 = vmatpush.msra.mxu0 %v441
    %v443 = vand.u32 %v408, 4294901760
    %444 = vmatpush.msra.mxu0 %v443
    %v445 = vand.u32 %v407, 4294901760
    %446 = vmatpush.msra.mxu0 %v445
    %v447 = vand.u32 %v416, 4294901760
    %v448 = vsub.f32 %v416, %v447
    %v449 = vand.u32 %v448, 4294901760
    %v450 = vsub.f32 %v448, %v449
    %v451 = vand.u32 %v450, 4294901760
    %452 = vmatmul.f32.gmra.mxu0 %v451
    %v453 = vpop.f32.mrf.mxu0
    %v454 = vadd.f32 %v413, %v453
    %v455 = vand.u32 %v419, 4294901760
    %v456 = vsub.f32 %v419, %v455
    %v457 = vand.u32 %v456, 4294901760
    %v458 = vsub.f32 %v456, %v457
    %v459 = vand.u32 %v458, 4294901760
    %460 = vmatmul.f32.gmra.mxu0 %v459
    %v461 = vpop.f32.mrf.mxu0
    %v462 = vadd.f32 %v413, %v461
    %v463 = vand.u32 %v422, 4294901760
    %v464 = vsub.f32 %v422, %v463
    %v465 = vand.u32 %v464, 4294901760
    %v466 = vsub.f32 %v464, %v465
    %v467 = vand.u32 %v466, 4294901760
    %468 = vmatmul.f32.gmra.mxu0 %v467
    %v469 = vpop.f32.mrf.mxu0
    %v470 = vadd.f32 %v413, %v469
    %v471 = vand.u32 %v425, 4294901760
    %v472 = vsub.f32 %v425, %v471
    %v473 = vand.u32 %v472, 4294901760
    %v474 = vsub.f32 %v472, %v473
    %v475 = vand.u32 %v474, 4294901760
    %476 = vmatmul.f32.gmra.mxu0 %v475
    %v477 = vpop.f32.mrf.mxu0
    %v478 = vadd.f32 %v413, %v477
    %479 = vdwg.mxu0
    %480 = vmatpush.msra.mxu0 0.0
    %481 = vmatpush.msra.mxu0 0.0
    %482 = vmatpush.msra.mxu0 0.0
    %483 = vmatpush.msra.mxu0 0.0
    %484 = vmatpush.msra.mxu0 0.0
    %485 = vmatpush.msra.mxu0 0.0
    %486 = vmatpush.msra.mxu0 0.0
    %487 = vmatpush.msra.mxu0 0.0
    %488 = vmatpush.msra.mxu0 0.0
    %489 = vmatpush.msra.mxu0 0.0
    %490 = vmatpush.msra.mxu0 0.0
    %491 = vmatpush.msra.mxu0 0.0
    %v492 = vand.u32 %v410, 4294901760
    %v493 = vsub.f32 %v410, %v492
    %v494 = vand.u32 %v493, 4294901760
    %v495 = vsub.f32 %v493, %v494
    %v496 = vand.u32 %v495, 4294901760
    %497 = vmatpush.msra.mxu0 %v496
    %v498 = vand.u32 %v409, 4294901760
    %v499 = vsub.f32 %v409, %v498
    %v500 = vand.u32 %v499, 4294901760
    %v501 = vsub.f32 %v499, %v500
    %v502 = vand.u32 %v501, 4294901760
    %503 = vmatpush.msra.mxu0 %v502
    %v504 = vand.u32 %v408, 4294901760
    %v505 = vsub.f32 %v408, %v504
    %v506 = vand.u32 %v505, 4294901760
    %v507 = vsub.f32 %v505, %v506
    %v508 = vand.u32 %v507, 4294901760
    %509 = vmatpush.msra.mxu0 %v508
    %v510 = vand.u32 %v407, 4294901760
    %v511 = vsub.f32 %v407, %v510
    %v512 = vand.u32 %v511, 4294901760
    %v513 = vsub.f32 %v511, %v512
    %v514 = vand.u32 %v513, 4294901760
    %515 = vmatpush.msra.mxu0 %v514
    %v516 = vand.u32 %v416, 4294901760
    %517 = vmatmul.f32.gmra.mxu0 %v516
    %v518 = vpop.f32.mrf.mxu0
    %v519 = vadd.f32 %v454, %v518
    %v520 = vand.u32 %v419, 4294901760
    %521 = vmatmul.f32.gmra.mxu0 %v520
    %v522 = vpop.f32.mrf.mxu0
    %v523 = vadd.f32 %v462, %v522
    %v524 = vand.u32 %v422, 4294901760
    %525 = vmatmul.f32.gmra.mxu0 %v524
    %v526 = vpop.f32.mrf.mxu0
    %v527 = vadd.f32 %v470, %v526
    %v528 = vand.u32 %v425, 4294901760
    %529 = vmatmul.f32.gmra.mxu0 %v528
    %v530 = vpop.f32.mrf.mxu0
    %v531 = vadd.f32 %v478, %v530
    %532 = vdwg.mxu0
    %533 = vmatpush.msra.mxu0 0.0
    %534 = vmatpush.msra.mxu0 0.0
    %535 = vmatpush.msra.mxu0 0.0
    %536 = vmatpush.msra.mxu0 0.0
    %537 = vmatpush.msra.mxu0 0.0
    %538 = vmatpush.msra.mxu0 0.0
    %539 = vmatpush.msra.mxu0 0.0
    %540 = vmatpush.msra.mxu0 0.0
    %541 = vmatpush.msra.mxu0 0.0
    %542 = vmatpush.msra.mxu0 0.0
    %543 = vmatpush.msra.mxu0 0.0
    %544 = vmatpush.msra.mxu0 0.0
    %v545 = vand.u32 %v410, 4294901760
    %v546 = vsub.f32 %v410, %v545
    %547 = vmatpush.msra.mxu0 %v546
    %v548 = vand.u32 %v409, 4294901760
    %v549 = vsub.f32 %v409, %v548
    %550 = vmatpush.msra.mxu0 %v549
    %v551 = vand.u32 %v408, 4294901760
    %v552 = vsub.f32 %v408, %v551
    %553 = vmatpush.msra.mxu0 %v552
    %v554 = vand.u32 %v407, 4294901760
    %v555 = vsub.f32 %v407, %v554
    %556 = vmatpush.msra.mxu0 %v555
    %v557 = vand.u32 %v416, 4294901760
    %v558 = vsub.f32 %v416, %v557
    %559 = vmatmul.f32.gmra.mxu0 %v558
    %v560 = vpop.f32.mrf.mxu0
    %v561 = vadd.f32 %v519, %v560
    %v562 = vand.u32 %v419, 4294901760
    %v563 = vsub.f32 %v419, %v562
    %564 = vmatmul.f32.gmra.mxu0 %v563
    %v565 = vpop.f32.mrf.mxu0
    %v566 = vadd.f32 %v523, %v565
    %v567 = vand.u32 %v422, 4294901760
    %v568 = vsub.f32 %v422, %v567
    %569 = vmatmul.f32.gmra.mxu0 %v568
    %v570 = vpop.f32.mrf.mxu0
    %v571 = vadd.f32 %v527, %v570
    %v572 = vand.u32 %v425, 4294901760
    %v573 = vsub.f32 %v425, %v572
    %574 = vmatmul.f32.gmra.mxu0 %v573
    %v575 = vpop.f32.mrf.mxu0
    %v576 = vadd.f32 %v531, %v575
    %577 = vdwg.mxu0
    %578 = vmatpush.msra.mxu0 0.0
    %579 = vmatpush.msra.mxu0 0.0
    %580 = vmatpush.msra.mxu0 0.0
    %581 = vmatpush.msra.mxu0 0.0
    %582 = vmatpush.msra.mxu0 0.0
    %583 = vmatpush.msra.mxu0 0.0
    %584 = vmatpush.msra.mxu0 0.0
    %585 = vmatpush.msra.mxu0 0.0
    %586 = vmatpush.msra.mxu0 0.0
    %587 = vmatpush.msra.mxu0 0.0
    %588 = vmatpush.msra.mxu0 0.0
    %589 = vmatpush.msra.mxu0 0.0
    %v590 = vand.u32 %v410, 4294901760
    %591 = vmatpush.msra.mxu0 %v590
    %v592 = vand.u32 %v409, 4294901760
    %593 = vmatpush.msra.mxu0 %v592
    %v594 = vand.u32 %v408, 4294901760
    %595 = vmatpush.msra.mxu0 %v594
    %v596 = vand.u32 %v407, 4294901760
    %597 = vmatpush.msra.mxu0 %v596
    %v598 = vand.u32 %v416, 4294901760
    %v599 = vsub.f32 %v416, %v598
    %v600 = vand.u32 %v599, 4294901760
    %601 = vmatmul.f32.gmra.mxu0 %v600
    %v602 = vpop.f32.mrf.mxu0
    %v603 = vadd.f32 %v561, %v602
    %v604 = vand.u32 %v419, 4294901760
    %v605 = vsub.f32 %v419, %v604
    %v606 = vand.u32 %v605, 4294901760
    %607 = vmatmul.f32.gmra.mxu0 %v606
    %v608 = vpop.f32.mrf.mxu0
    %v609 = vadd.f32 %v566, %v608
    %v610 = vand.u32 %v422, 4294901760
    %v611 = vsub.f32 %v422, %v610
    %v612 = vand.u32 %v611, 4294901760
    %613 = vmatmul.f32.gmra.mxu0 %v612
    %v614 = vpop.f32.mrf.mxu0
    %v615 = vadd.f32 %v571, %v614
    %v616 = vand.u32 %v425, 4294901760
    %v617 = vsub.f32 %v425, %v616
    %v618 = vand.u32 %v617, 4294901760
    %619 = vmatmul.f32.gmra.mxu0 %v618
    %v620 = vpop.f32.mrf.mxu0
    %v621 = vadd.f32 %v576, %v620
    %622 = vdwg.mxu0
    %623 = vmatpush.msra.mxu0 0.0
    %624 = vmatpush.msra.mxu0 0.0
    %625 = vmatpush.msra.mxu0 0.0
    %626 = vmatpush.msra.mxu0 0.0
    %627 = vmatpush.msra.mxu0 0.0
    %628 = vmatpush.msra.mxu0 0.0
    %629 = vmatpush.msra.mxu0 0.0
    %630 = vmatpush.msra.mxu0 0.0
    %631 = vmatpush.msra.mxu0 0.0
    %632 = vmatpush.msra.mxu0 0.0
    %633 = vmatpush.msra.mxu0 0.0
    %634 = vmatpush.msra.mxu0 0.0
    %v635 = vand.u32 %v410, 4294901760
    %v636 = vsub.f32 %v410, %v635
    %v637 = vand.u32 %v636, 4294901760
    %638 = vmatpush.msra.mxu0 %v637
    %v639 = vand.u32 %v409, 4294901760
    %v640 = vsub.f32 %v409, %v639
    %v641 = vand.u32 %v640, 4294901760
    %642 = vmatpush.msra.mxu0 %v641
    %v643 = vand.u32 %v408, 4294901760
    %v644 = vsub.f32 %v408, %v643
    %v645 = vand.u32 %v644, 4294901760
    %646 = vmatpush.msra.mxu0 %v645
    %v647 = vand.u32 %v407, 4294901760
    %v648 = vsub.f32 %v407, %v647
    %v649 = vand.u32 %v648, 4294901760
    %650 = vmatpush.msra.mxu0 %v649
    %v651 = vand.u32 %v416, 4294901760
    %652 = vmatmul.f32.gmra.mxu0 %v651
    %v653 = vpop.f32.mrf.mxu0
    %v654 = vadd.f32 %v603, %v653
    %v655 = vand.u32 %v419, 4294901760
    %656 = vmatmul.f32.gmra.mxu0 %v655
    %v657 = vpop.f32.mrf.mxu0
    %v658 = vadd.f32 %v609, %v657
    %v659 = vand.u32 %v422, 4294901760
    %660 = vmatmul.f32.gmra.mxu0 %v659
    %v661 = vpop.f32.mrf.mxu0
    %v662 = vadd.f32 %v615, %v661
    %v663 = vand.u32 %v425, 4294901760
    %664 = vmatmul.f32.gmra.mxu0 %v663
    %v665 = vpop.f32.mrf.mxu0
    %v666 = vadd.f32 %v621, %v665
    %667 = vdwg.mxu0
    %668 = vmatpush.msra.mxu0 0.0
    %669 = vmatpush.msra.mxu0 0.0
    %670 = vmatpush.msra.mxu0 0.0
    %671 = vmatpush.msra.mxu0 0.0
    %672 = vmatpush.msra.mxu0 0.0
    %673 = vmatpush.msra.mxu0 0.0
    %674 = vmatpush.msra.mxu0 0.0
    %675 = vmatpush.msra.mxu0 0.0
    %676 = vmatpush.msra.mxu0 0.0
    %677 = vmatpush.msra.mxu0 0.0
    %678 = vmatpush.msra.mxu0 0.0
    %679 = vmatpush.msra.mxu0 0.0
    %v680 = vand.u32 %v410, 4294901760
    %681 = vmatpush.msra.mxu0 %v680
    %v682 = vand.u32 %v409, 4294901760
    %683 = vmatpush.msra.mxu0 %v682
    %v684 = vand.u32 %v408, 4294901760
    %685 = vmatpush.msra.mxu0 %v684
    %v686 = vand.u32 %v407, 4294901760
    %687 = vmatpush.msra.mxu0 %v686
    %v688 = vand.u32 %v416, 4294901760
    %689 = vmatmul.f32.gmra.mxu0 %v688
    %v690 = vpop.f32.mrf.mxu0
    %v691 = vadd.f32 %v654, %v690
    %v692 = vand.u32 %v419, 4294901760
    %693 = vmatmul.f32.gmra.mxu0 %v692
    %v694 = vpop.f32.mrf.mxu0
    %v695 = vadd.f32 %v658, %v694
    %v696 = vand.u32 %v422, 4294901760
    %697 = vmatmul.f32.gmra.mxu0 %v696
    %v698 = vpop.f32.mrf.mxu0
    %v699 = vadd.f32 %v662, %v698
    %v700 = vand.u32 %v425, 4294901760
    %701 = vmatmul.f32.gmra.mxu0 %v700
    %v702 = vpop.f32.mrf.mxu0
    %v703 = vadd.f32 %v666, %v702
    %704 = vdwg.mxu0
    %v705 = vtanh.pop %v691
    %v706 = vtanh.pop %v695
    %v707 = vtanh.pop %v699
    %v708 = vtanh.pop %v703
    %vm709 = vcmask 64512
    %v710 = vsel %vm709, %v705, -inf
    %v711 = vrot.slane %v710, 4
    %v712 = vmax.f32 %v710, %v711
    %v713 = vrot.slane %v712, 2
    %v714 = vmax.f32 %v712, %v713
    %v715 = vrot.slane %v714, 1
    %v716 = vmax.f32 %v714, %v715
    %v717 = vsel %vm709, %v706, -inf
    %v718 = vrot.slane %v717, 4
    %v719 = vmax.f32 %v717, %v718
    %v720 = vrot.slane %v719, 2
    %v721 = vmax.f32 %v719, %v720
    %v722 = vrot.slane %v721, 1
    %v723 = vmax.f32 %v721, %v722
    %v724 = vsel %vm709, %v707, -inf
    %v725 = vrot.slane %v724, 4
    %v726 = vmax.f32 %v724, %v725
    %v727 = vrot.slane %v726, 2
    %v728 = vmax.f32 %v726, %v727
    %v729 = vrot.slane %v728, 1
    %v730 = vmax.f32 %v728, %v729
    %v731 = vsel %vm709, %v708, -inf
    %v732 = vrot.slane %v731, 4
    %v733 = vmax.f32 %v731, %v732
    %v734 = vrot.slane %v733, 2
    %v735 = vmax.f32 %v733, %v734
    %v736 = vrot.slane %v735, 1
    %v737 = vmax.f32 %v735, %v736
    %v738 = vsub.f32 %v705, %v716
    %v739 = vsub.f32 %v706, %v723
    %v740 = vsub.f32 %v707, %v730
    %v741 = vsub.f32 %v708, %v737
    %v742 = vmul.f32 %v738, 1.442695
    %v743 = vpow.pop %v742
    %v744 = vmul.f32 %v739, 1.442695
    %v745 = vpow.pop %v744
    %v746 = vmul.f32 %v740, 1.442695
    %v747 = vpow.pop %v746
    %v748 = vmul.f32 %v741, 1.442695
    %v749 = vpow.pop %v748
    %v750 = vsel %vm709, %v743, 0.0
    %v751 = vrot.slane %v750, 4
    %v752 = vadd.f32 %v750, %v751
    %v753 = vrot.slane %v752, 2
    %v754 = vadd.f32 %v752, %v753
    %v755 = vrot.slane %v754, 1
    %v756 = vadd.f32 %v754, %v755
    %v757 = vsel %vm709, %v745, 0.0
    %v758 = vrot.slane %v757, 4
    %v759 = vadd.f32 %v757, %v758
    %v760 = vrot.slane %v759, 2
    %v761 = vadd.f32 %v759, %v760
    %v762 = vrot.slane %v761, 1
    %v763 = vadd.f32 %v761, %v762
    %v764 = vsel %vm709, %v747, 0.0
    %v765 = vrot.slane %v764, 4
    %v766 = vadd.f32 %v764, %v765
    %v767 = vrot.slane %v766, 2
    %v768 = vadd.f32 %v766, %v767
    %v769 = vrot.slane %v768, 1
    %v770 = vadd.f32 %v768, %v769
    %v771 = vsel %vm709, %v749, 0.0
    %v772 = vrot.slane %v771, 4
    %v773 = vadd.f32 %v771, %v772
    %v774 = vrot.slane %v773, 2
    %v775 = vadd.f32 %v773, %v774
    %v776 = vrot.slane %v775, 1
    %v777 = vadd.f32 %v775, %v776
    %v778 = vrcp.pop %v756
    %v779 = vmul.f32 %v756, %v778
    %v780 = vsub.f32 1.0, %v779
    %v781 = vmul.f32 %v778, %v780
    %v782 = vadd.f32 %v778, %v781
    %vm783 = vweird.f32 %v756
    %vm784 = vweird.f32 %v778
    %vm785 = vmor %vm783, %vm784
    %v786 = vsel %vm785, %v778, %v782
    %v787 = vand.u32 2147483647, %v756
    %vm788 = vcmp.eq.f32.partialorder %v787, 8.507059e+37
    %v789 = vand.u32 %v756, 2147483648
    %v790 = vor.u32 1.1754944e-38, %v789
    %v791 = vsel %vm788, %v790, %v786
    %v792 = vmul.f32 %v743, %v791
    %v793 = vrcp.pop %v763
    %v794 = vmul.f32 %v763, %v793
    %v795 = vsub.f32 1.0, %v794
    %v796 = vmul.f32 %v793, %v795
    %v797 = vadd.f32 %v793, %v796
    %vm798 = vweird.f32 %v763
    %vm799 = vweird.f32 %v793
    %vm800 = vmor %vm798, %vm799
    %v801 = vsel %vm800, %v793, %v797
    %v802 = vand.u32 2147483647, %v763
    %vm803 = vcmp.eq.f32.partialorder %v802, 8.507059e+37
    %v804 = vand.u32 %v763, 2147483648
    %v805 = vor.u32 1.1754944e-38, %v804
    %v806 = vsel %vm803, %v805, %v801
    %v807 = vmul.f32 %v745, %v806
    %v808 = vrcp.pop %v770
    %v809 = vmul.f32 %v770, %v808
    %v810 = vsub.f32 1.0, %v809
    %v811 = vmul.f32 %v808, %v810
    %v812 = vadd.f32 %v808, %v811
    %vm813 = vweird.f32 %v770
    %vm814 = vweird.f32 %v808
    %vm815 = vmor %vm813, %vm814
    %v816 = vsel %vm815, %v808, %v812
    %v817 = vand.u32 2147483647, %v770
    %vm818 = vcmp.eq.f32.partialorder %v817, 8.507059e+37
    %v819 = vand.u32 %v770, 2147483648
    %v820 = vor.u32 1.1754944e-38, %v819
    %v821 = vsel %vm818, %v820, %v816
    %v822 = vmul.f32 %v747, %v821
    %v823 = vrcp.pop %v777
    %v824 = vmul.f32 %v777, %v823
    %v825 = vsub.f32 1.0, %v824
    %v826 = vmul.f32 %v823, %v825
    %v827 = vadd.f32 %v823, %v826
    %vm828 = vweird.f32 %v777
    %vm829 = vweird.f32 %v823
    %vm830 = vmor %vm828, %vm829
    %v831 = vsel %vm830, %v823, %v827
    %v832 = vand.u32 2147483647, %v777
    %vm833 = vcmp.eq.f32.partialorder %v832, 8.507059e+37
    %v834 = vand.u32 %v777, 2147483648
    %v835 = vor.u32 1.1754944e-38, %v834
    %v836 = vsel %vm833, %v835, %v831
    %v837 = vmul.f32 %v749, %v836
    %v838 = vld [vmem:[%s6] sm:$0x1]
    %v840 = vperm.slane %v838, 0
    %v842 = vmul.f32 %v792, %v840
    %v843 = vmul.f32 %v807, %v840
    %v844 = vmul.f32 %v822, %v840
    %v845 = vmul.f32 %v837, %v840
    %v846 = vsel %vm709, %v842, 0.0
    %847 = vadd.xlane.f32.xlu0 %v846
    %v848 = vpop.xlane.xlu0 %847
    %v849 = vsel %vm709, %v843, 0.0
    %850 = vadd.xlane.f32.xlu0 %v849
    %v851 = vpop.xlane.xlu0 %850
    %v852 = vsel %vm709, %v844, 0.0
    %853 = vadd.xlane.f32.xlu0 %v852
    %v854 = vpop.xlane.xlu0 %853
    %v855 = vsel %vm709, %v845, 0.0
    %856 = vadd.xlane.f32.xlu0 %v855
    %v857 = vpop.xlane.xlu0 %856
    %v858 = vmul.f32 %v848, %v100
    %v859 = vmul.f32 %v851, %v101
    %v860 = vmul.f32 %v854, %v102
    %v861 = vmul.f32 %v857, %v103
    %v862 = vsel %vm112, %v858, 0.0
    %v863 = vrot.slane %v862, 4
    %v864 = vadd.f32 %v862, %v863
    %v865 = vrot.slane %v864, 2
    %v866 = vadd.f32 %v864, %v865
    %v867 = vrot.slane %v866, 1
    %v868 = vadd.f32 %v866, %v867
    %v869 = vsel %vm112, %v859, 0.0
    %v870 = vrot.slane %v869, 4
    %v871 = vadd.f32 %v869, %v870
    %v872 = vrot.slane %v871, 2
    %v873 = vadd.f32 %v871, %v872
    %v874 = vrot.slane %v873, 1
    %v875 = vadd.f32 %v873, %v874
    %v876 = vsel %vm112, %v860, 0.0
    %v877 = vrot.slane %v876, 4
    %v878 = vadd.f32 %v876, %v877
    %v879 = vrot.slane %v878, 2
    %v880 = vadd.f32 %v878, %v879
    %v881 = vrot.slane %v880, 1
    %v882 = vadd.f32 %v880, %v881
    %v883 = vsel %vm112, %v861, 0.0
    %v884 = vrot.slane %v883, 4
    %v885 = vadd.f32 %v883, %v884
    %v886 = vrot.slane %v885, 2
    %v887 = vadd.f32 %v885, %v886
    %v888 = vrot.slane %v887, 1
    %v889 = vadd.f32 %v887, %v888
    %v890 = vld [vmem:[#allocation2] sm:$0x1]
    %v892 = vperm.slane %v890, 0
    %893 = vset.pattern.permute.xlu0 0
    %894 = vperm.xlu0 %893, %v892
    %v895 = vpop.permute.xlu0 %894
    %v897 = vadd.f32 %v868, %v895
    %v898 = vadd.f32 %v875, %v895
    %v899 = vadd.f32 %v882, %v895
    %v900 = vadd.f32 %v889, %v895
    %v901 = vtanh.pop %v897
    %v902 = vtanh.pop %v898
    %v903 = vtanh.pop %v899
    %v904 = vtanh.pop %v900
    %v905 = vld [vmem:[%s1] sm:$0xf]
    %v906 = vld [vmem:[%s8] sm:$0xff]
    %v907 = vld [vmem:[%s8 + $0x8] sm:$0xff]
    %v908 = vld [vmem:[%s8 + $0x10] sm:$0xff]
    %v909 = vld [vmem:[%s8 + $0x18] sm:$0xff]
    %v910 = vld [vmem:[%s9] sm:$0x1]
    %v912 = vperm.slane %v910, 0
    %v915 = vsel %vm112, %v905, 0
    %917 = vmatpush.msra.mxu0 0.0
    %918 = vmatpush.msra.mxu0 0.0
    %919 = vmatpush.msra.mxu0 0.0
    %920 = vmatpush.msra.mxu0 0.0
    %921 = vmatpush.msra.mxu0 0.0
    %922 = vmatpush.msra.mxu0 0.0
    %923 = vmatpush.msra.mxu0 0.0
    %924 = vmatpush.msra.mxu0 0.0
    %925 = vmatpush.msra.mxu0 0.0
    %926 = vmatpush.msra.mxu0 0.0
    %927 = vmatpush.msra.mxu0 0.0
    %928 = vmatpush.msra.mxu0 0.0
    %v929 = vand.u32 %v909, 4294901760
    %930 = vmatpush.msra.mxu0 %v929
    %v931 = vand.u32 %v908, 4294901760
    %932 = vmatpush.msra.mxu0 %v931
    %v933 = vand.u32 %v907, 4294901760
    %934 = vmatpush.msra.mxu0 %v933
    %v935 = vand.u32 %v906, 4294901760
    %936 = vmatpush.msra.mxu0 %v935
    %v937 = vand.u32 %v915, 4294901760
    %v938 = vsub.f32 %v915, %v937
    %v939 = vand.u32 %v938, 4294901760
    %v940 = vsub.f32 %v938, %v939
    %v941 = vand.u32 %v940, 4294901760
    %942 = vmatmul.f32.gmra.mxu0 %v941
    %v943 = vpop.f32.mrf.mxu0
    %v944 = vadd.f32 %v912, %v943
    %945 = vdwg.mxu0
    %946 = vmatpush.msra.mxu0 0.0
    %947 = vmatpush.msra.mxu0 0.0
    %948 = vmatpush.msra.mxu0 0.0
    %949 = vmatpush.msra.mxu0 0.0
    %950 = vmatpush.msra.mxu0 0.0
    %951 = vmatpush.msra.mxu0 0.0
    %952 = vmatpush.msra.mxu0 0.0
    %953 = vmatpush.msra.mxu0 0.0
    %954 = vmatpush.msra.mxu0 0.0
    %955 = vmatpush.msra.mxu0 0.0
    %956 = vmatpush.msra.mxu0 0.0
    %957 = vmatpush.msra.mxu0 0.0
    %v958 = vand.u32 %v909, 4294901760
    %v959 = vsub.f32 %v909, %v958
    %v960 = vand.u32 %v959, 4294901760
    %v961 = vsub.f32 %v959, %v960
    %v962 = vand.u32 %v961, 4294901760
    %963 = vmatpush.msra.mxu0 %v962
    %v964 = vand.u32 %v908, 4294901760
    %v965 = vsub.f32 %v908, %v964
    %v966 = vand.u32 %v965, 4294901760
    %v967 = vsub.f32 %v965, %v966
    %v968 = vand.u32 %v967, 4294901760
    %969 = vmatpush.msra.mxu0 %v968
    %v970 = vand.u32 %v907, 4294901760
    %v971 = vsub.f32 %v907, %v970
    %v972 = vand.u32 %v971, 4294901760
    %v973 = vsub.f32 %v971, %v972
    %v974 = vand.u32 %v973, 4294901760
    %975 = vmatpush.msra.mxu0 %v974
    %v976 = vand.u32 %v906, 4294901760
    %v977 = vsub.f32 %v906, %v976
    %v978 = vand.u32 %v977, 4294901760
    %v979 = vsub.f32 %v977, %v978
    %v980 = vand.u32 %v979, 4294901760
    %981 = vmatpush.msra.mxu0 %v980
    %v982 = vand.u32 %v915, 4294901760
    %983 = vmatmul.f32.gmra.mxu0 %v982
    %v984 = vpop.f32.mrf.mxu0
    %v985 = vadd.f32 %v944, %v984
    %986 = vdwg.mxu0
    %987 = vmatpush.msra.mxu0 0.0
    %988 = vmatpush.msra.mxu0 0.0
    %989 = vmatpush.msra.mxu0 0.0
    %990 = vmatpush.msra.mxu0 0.0
    %991 = vmatpush.msra.mxu0 0.0
    %992 = vmatpush.msra.mxu0 0.0
    %993 = vmatpush.msra.mxu0 0.0
    %994 = vmatpush.msra.mxu0 0.0
    %995 = vmatpush.msra.mxu0 0.0
    %996 = vmatpush.msra.mxu0 0.0
    %997 = vmatpush.msra.mxu0 0.0
    %998 = vmatpush.msra.mxu0 0.0
    %v999 = vand.u32 %v909, 4294901760
    %v1000 = vsub.f32 %v909, %v999
    %1001 = vmatpush.msra.mxu0 %v1000
    %v1002 = vand.u32 %v908, 4294901760
    %v1003 = vsub.f32 %v908, %v1002
    %1004 = vmatpush.msra.mxu0 %v1003
    %v1005 = vand.u32 %v907, 4294901760
    %v1006 = vsub.f32 %v907, %v1005
    %1007 = vmatpush.msra.mxu0 %v1006
    %v1008 = vand.u32 %v906, 4294901760
    %v1009 = vsub.f32 %v906, %v1008
    %1010 = vmatpush.msra.mxu0 %v1009
    %v1011 = vand.u32 %v915, 4294901760
    %v1012 = vsub.f32 %v915, %v1011
    %1013 = vmatmul.f32.gmra.mxu0 %v1012
    %v1014 = vpop.f32.mrf.mxu0
    %v1015 = vadd.f32 %v985, %v1014
    %1016 = vdwg.mxu0
    %1017 = vmatpush.msra.mxu0 0.0
    %1018 = vmatpush.msra.mxu0 0.0
    %1019 = vmatpush.msra.mxu0 0.0
    %1020 = vmatpush.msra.mxu0 0.0
    %1021 = vmatpush.msra.mxu0 0.0
    %1022 = vmatpush.msra.mxu0 0.0
    %1023 = vmatpush.msra.mxu0 0.0
    %1024 = vmatpush.msra.mxu0 0.0
    %1025 = vmatpush.msra.mxu0 0.0
    %1026 = vmatpush.msra.mxu0 0.0
    %1027 = vmatpush.msra.mxu0 0.0
    %1028 = vmatpush.msra.mxu0 0.0
    %v1029 = vand.u32 %v909, 4294901760
    %1030 = vmatpush.msra.mxu0 %v1029
    %v1031 = vand.u32 %v908, 4294901760
    %1032 = vmatpush.msra.mxu0 %v1031
    %v1033 = vand.u32 %v907, 4294901760
    %1034 = vmatpush.msra.mxu0 %v1033
    %v1035 = vand.u32 %v906, 4294901760
    %1036 = vmatpush.msra.mxu0 %v1035
    %v1037 = vand.u32 %v915, 4294901760
    %v1038 = vsub.f32 %v915, %v1037
    %v1039 = vand.u32 %v1038, 4294901760
    %1040 = vmatmul.f32.gmra.mxu0 %v1039
    %v1041 = vpop.f32.mrf.mxu0
    %v1042 = vadd.f32 %v1015, %v1041
    %1043 = vdwg.mxu0
    %1044 = vmatpush.msra.mxu0 0.0
    %1045 = vmatpush.msra.mxu0 0.0
    %1046 = vmatpush.msra.mxu0 0.0
    %1047 = vmatpush.msra.mxu0 0.0
    %1048 = vmatpush.msra.mxu0 0.0
    %1049 = vmatpush.msra.mxu0 0.0
    %1050 = vmatpush.msra.mxu0 0.0
    %1051 = vmatpush.msra.mxu0 0.0
    %1052 = vmatpush.msra.mxu0 0.0
    %1053 = vmatpush.msra.mxu0 0.0
    %1054 = vmatpush.msra.mxu0 0.0
    %1055 = vmatpush.msra.mxu0 0.0
    %v1056 = vand.u32 %v909, 4294901760
    %v1057 = vsub.f32 %v909, %v1056
    %v1058 = vand.u32 %v1057, 4294901760
    %1059 = vmatpush.msra.mxu0 %v1058
    %v1060 = vand.u32 %v908, 4294901760
    %v1061 = vsub.f32 %v908, %v1060
    %v1062 = vand.u32 %v1061, 4294901760
    %1063 = vmatpush.msra.mxu0 %v1062
    %v1064 = vand.u32 %v907, 4294901760
    %v1065 = vsub.f32 %v907, %v1064
    %v1066 = vand.u32 %v1065, 4294901760
    %1067 = vmatpush.msra.mxu0 %v1066
    %v1068 = vand.u32 %v906, 4294901760
    %v1069 = vsub.f32 %v906, %v1068
    %v1070 = vand.u32 %v1069, 4294901760
    %1071 = vmatpush.msra.mxu0 %v1070
    %v1072 = vand.u32 %v915, 4294901760
    %1073 = vmatmul.f32.gmra.mxu0 %v1072
    %v1074 = vpop.f32.mrf.mxu0
    %v1075 = vadd.f32 %v1042, %v1074
    %1076 = vdwg.mxu0
    %1077 = vmatpush.msra.mxu0 0.0
    %1078 = vmatpush.msra.mxu0 0.0
    %1079 = vmatpush.msra.mxu0 0.0
    %1080 = vmatpush.msra.mxu0 0.0
    %1081 = vmatpush.msra.mxu0 0.0
    %1082 = vmatpush.msra.mxu0 0.0
    %1083 = vmatpush.msra.mxu0 0.0
    %1084 = vmatpush.msra.mxu0 0.0
    %1085 = vmatpush.msra.mxu0 0.0
    %1086 = vmatpush.msra.mxu0 0.0
    %1087 = vmatpush.msra.mxu0 0.0
    %1088 = vmatpush.msra.mxu0 0.0
    %v1089 = vand.u32 %v909, 4294901760
    %1090 = vmatpush.msra.mxu0 %v1089
    %v1091 = vand.u32 %v908, 4294901760
    %1092 = vmatpush.msra.mxu0 %v1091
    %v1093 = vand.u32 %v907, 4294901760
    %1094 = vmatpush.msra.mxu0 %v1093
    %v1095 = vand.u32 %v906, 4294901760
    %1096 = vmatpush.msra.mxu0 %v1095
    %v1097 = vand.u32 %v915, 4294901760
    %1098 = vmatmul.f32.gmra.mxu0 %v1097
    %v1099 = vpop.f32.mrf.mxu0
    %v1100 = vadd.f32 %v1075, %v1099
    %1101 = vdwg.mxu0
    %v1102 = vtanh.pop %v1100
    %v1103 = vld [vmem:[#allocation3] sm:$0xff]
    %v1104 = vld [vmem:[#allocation3 + $0x8] sm:$0xff]
    %v1105 = vld [vmem:[#allocation3 + $0x10] sm:$0xff]
    %v1106 = vld [vmem:[%s11] sm:$0x1]
    %v1108 = vperm.slane %v1106, 0
    %vm1110 = vcmask 195584
    %v1112 = vsel %vm1110, %v1102, 0
    %1114 = vmatpush.msra.mxu0 0.0
    %1115 = vmatpush.msra.mxu0 0.0
    %1116 = vmatpush.msra.mxu0 0.0
    %1117 = vmatpush.msra.mxu0 0.0
    %1118 = vmatpush.msra.mxu0 0.0
    %1119 = vmatpush.msra.mxu0 0.0
    %1120 = vmatpush.msra.mxu0 0.0
    %1121 = vmatpush.msra.mxu0 0.0
    %1122 = vmatpush.msra.mxu0 0.0
    %1123 = vmatpush.msra.mxu0 0.0
    %1124 = vmatpush.msra.mxu0 0.0
    %1125 = vmatpush.msra.mxu0 0.0
    %1126 = vmatpush.msra.mxu0 0.0
    %v1127 = vand.u32 %v1105, 4294901760
    %1128 = vmatpush.msra.mxu0 %v1127
    %v1129 = vand.u32 %v1104, 4294901760
    %1130 = vmatpush.msra.mxu0 %v1129
    %v1131 = vand.u32 %v1103, 4294901760
    %1132 = vmatpush.msra.mxu0 %v1131
    %v1133 = vand.u32 %v1112, 4294901760
    %v1134 = vsub.f32 %v1112, %v1133
    %v1135 = vand.u32 %v1134, 4294901760
    %v1136 = vsub.f32 %v1134, %v1135
    %v1137 = vand.u32 %v1136, 4294901760
    %1138 = vmatmul.f32.gmra.mxu0 %v1137
    %v1139 = vpop.f32.mrf.mxu0
    %v1140 = vadd.f32 %v1108, %v1139
    %1141 = vdwg.mxu0
    %1142 = vmatpush.msra.mxu0 0.0
    %1143 = vmatpush.msra.mxu0 0.0
    %1144 = vmatpush.msra.mxu0 0.0
    %1145 = vmatpush.msra.mxu0 0.0
    %1146 = vmatpush.msra.mxu0 0.0
    %1147 = vmatpush.msra.mxu0 0.0
    %1148 = vmatpush.msra.mxu0 0.0
    %1149 = vmatpush.msra.mxu0 0.0
    %1150 = vmatpush.msra.mxu0 0.0
    %1151 = vmatpush.msra.mxu0 0.0
    %1152 = vmatpush.msra.mxu0 0.0
    %1153 = vmatpush.msra.mxu0 0.0
    %1154 = vmatpush.msra.mxu0 0.0
    %v1155 = vand.u32 %v1105, 4294901760
    %v1156 = vsub.f32 %v1105, %v1155
    %v1157 = vand.u32 %v1156, 4294901760
    %v1158 = vsub.f32 %v1156, %v1157
    %v1159 = vand.u32 %v1158, 4294901760
    %1160 = vmatpush.msra.mxu0 %v1159
    %v1161 = vand.u32 %v1104, 4294901760
    %v1162 = vsub.f32 %v1104, %v1161
    %v1163 = vand.u32 %v1162, 4294901760
    %v1164 = vsub.f32 %v1162, %v1163
    %v1165 = vand.u32 %v1164, 4294901760
    %1166 = vmatpush.msra.mxu0 %v1165
    %v1167 = vand.u32 %v1103, 4294901760
    %v1168 = vsub.f32 %v1103, %v1167
    %v1169 = vand.u32 %v1168, 4294901760
    %v1170 = vsub.f32 %v1168, %v1169
    %v1171 = vand.u32 %v1170, 4294901760
    %1172 = vmatpush.msra.mxu0 %v1171
    %v1173 = vand.u32 %v1112, 4294901760
    %1174 = vmatmul.f32.gmra.mxu0 %v1173
    %v1175 = vpop.f32.mrf.mxu0
    %v1176 = vadd.f32 %v1140, %v1175
    %1177 = vdwg.mxu0
    %1178 = vmatpush.msra.mxu0 0.0
    %1179 = vmatpush.msra.mxu0 0.0
    %1180 = vmatpush.msra.mxu0 0.0
    %1181 = vmatpush.msra.mxu0 0.0
    %1182 = vmatpush.msra.mxu0 0.0
    %1183 = vmatpush.msra.mxu0 0.0
    %1184 = vmatpush.msra.mxu0 0.0
    %1185 = vmatpush.msra.mxu0 0.0
    %1186 = vmatpush.msra.mxu0 0.0
    %1187 = vmatpush.msra.mxu0 0.0
    %1188 = vmatpush.msra.mxu0 0.0
    %1189 = vmatpush.msra.mxu0 0.0
    %1190 = vmatpush.msra.mxu0 0.0
    %v1191 = vand.u32 %v1105, 4294901760
    %v1192 = vsub.f32 %v1105, %v1191
    %1193 = vmatpush.msra.mxu0 %v1192
    %v1194 = vand.u32 %v1104, 4294901760
    %v1195 = vsub.f32 %v1104, %v1194
    %1196 = vmatpush.msra.mxu0 %v1195
    %v1197 = vand.u32 %v1103, 4294901760
    %v1198 = vsub.f32 %v1103, %v1197
    %1199 = vmatpush.msra.mxu0 %v1198
    %v1200 = vand.u32 %v1112, 4294901760
    %v1201 = vsub.f32 %v1112, %v1200
    %1202 = vmatmul.f32.gmra.mxu0 %v1201
    %v1203 = vpop.f32.mrf.mxu0
    %v1204 = vadd.f32 %v1176, %v1203
    %1205 = vdwg.mxu0
    %1206 = vmatpush.msra.mxu0 0.0
    %1207 = vmatpush.msra.mxu0 0.0
    %1208 = vmatpush.msra.mxu0 0.0
    %1209 = vmatpush.msra.mxu0 0.0
    %1210 = vmatpush.msra.mxu0 0.0
    %1211 = vmatpush.msra.mxu0 0.0
    %1212 = vmatpush.msra.mxu0 0.0
    %1213 = vmatpush.msra.mxu0 0.0
    %1214 = vmatpush.msra.mxu0 0.0
    %1215 = vmatpush.msra.mxu0 0.0
    %1216 = vmatpush.msra.mxu0 0.0
    %1217 = vmatpush.msra.mxu0 0.0
    %1218 = vmatpush.msra.mxu0 0.0
    %v1219 = vand.u32 %v1105, 4294901760
    %1220 = vmatpush.msra.mxu0 %v1219
    %v1221 = vand.u32 %v1104, 4294901760
    %1222 = vmatpush.msra.mxu0 %v1221
    %v1223 = vand.u32 %v1103, 4294901760
    %1224 = vmatpush.msra.mxu0 %v1223
    %v1225 = vand.u32 %v1112, 4294901760
    %v1226 = vsub.f32 %v1112, %v1225
    %v1227 = vand.u32 %v1226, 4294901760
    %1228 = vmatmul.f32.gmra.mxu0 %v1227
    %v1229 = vpop.f32.mrf.mxu0
    %v1230 = vadd.f32 %v1204, %v1229
    %1231 = vdwg.mxu0
    %1232 = vmatpush.msra.mxu0 0.0
    %1233 = vmatpush.msra.mxu0 0.0
    %1234 = vmatpush.msra.mxu0 0.0
    %1235 = vmatpush.msra.mxu0 0.0
    %1236 = vmatpush.msra.mxu0 0.0
    %1237 = vmatpush.msra.mxu0 0.0
    %1238 = vmatpush.msra.mxu0 0.0
    %1239 = vmatpush.msra.mxu0 0.0
    %1240 = vmatpush.msra.mxu0 0.0
    %1241 = vmatpush.msra.mxu0 0.0
    %1242 = vmatpush.msra.mxu0 0.0
    %1243 = vmatpush.msra.mxu0 0.0
    %1244 = vmatpush.msra.mxu0 0.0
    %v1245 = vand.u32 %v1105, 4294901760
    %v1246 = vsub.f32 %v1105, %v1245
    %v1247 = vand.u32 %v1246, 4294901760
    %1248 = vmatpush.msra.mxu0 %v1247
    %v1249 = vand.u32 %v1104, 4294901760
    %v1250 = vsub.f32 %v1104, %v1249
    %v1251 = vand.u32 %v1250, 4294901760
    %1252 = vmatpush.msra.mxu0 %v1251
    %v1253 = vand.u32 %v1103, 4294901760
    %v1254 = vsub.f32 %v1103, %v1253
    %v1255 = vand.u32 %v1254, 4294901760
    %1256 = vmatpush.msra.mxu0 %v1255
    %v1257 = vand.u32 %v1112, 4294901760
    %1258 = vmatmul.f32.gmra.mxu0 %v1257
    %v1259 = vpop.f32.mrf.mxu0
    %v1260 = vadd.f32 %v1230, %v1259
    %1261 = vdwg.mxu0
    %1262 = vmatpush.msra.mxu0 0.0
    %1263 = vmatpush.msra.mxu0 0.0
    %1264 = vmatpush.msra.mxu0 0.0
    %1265 = vmatpush.msra.mxu0 0.0
    %1266 = vmatpush.msra.mxu0 0.0
    %1267 = vmatpush.msra.mxu0 0.0
    %1268 = vmatpush.msra.mxu0 0.0
    %1269 = vmatpush.msra.mxu0 0.0
    %1270 = vmatpush.msra.mxu0 0.0
    %1271 = vmatpush.msra.mxu0 0.0
    %1272 = vmatpush.msra.mxu0 0.0
    %1273 = vmatpush.msra.mxu0 0.0
    %1274 = vmatpush.msra.mxu0 0.0
    %v1275 = vand.u32 %v1105, 4294901760
    %1276 = vmatpush.msra.mxu0 %v1275
    %v1277 = vand.u32 %v1104, 4294901760
    %1278 = vmatpush.msra.mxu0 %v1277
    %v1279 = vand.u32 %v1103, 4294901760
    %1280 = vmatpush.msra.mxu0 %v1279
    %v1281 = vand.u32 %v1112, 4294901760
    %1282 = vmatmul.f32.gmra.mxu0 %v1281
    %v1283 = vpop.f32.mrf.mxu0
    %v1284 = vadd.f32 %v1260, %v1283
    %1285 = vdwg.mxu0
    %v1286 = vtanh.pop %v1284
    %v1287 = vld [vmem:[#allocation6] sm:$0xff]
    %v1288 = vld [vmem:[#allocation6 + $0x8] sm:$0xff]
    %v1289 = vld [vmem:[#allocation6 + $0x10] sm:$0xff]
    %v1290 = vld [vmem:[#allocation6 + $0x18] sm:$0xff]
    %v1291 = vld [vmem:[#allocation8] sm:$0xff]
    %v1292 = vld [vmem:[#allocation8 + $0x8] sm:$0xff]
    %v1293 = vld [vmem:[#allocation8 + $0x10] sm:$0xff]
    %v1294 = vld [vmem:[#allocation8 + $0x18] sm:$0xff]
    %vm1299 = vcmask 1041409
    %v1300 = vsel %vm1299, %v902, %v901
    %vm1301 = vcmask 1042434
    %v1302 = vsel %vm1301, %v903, %v1300
    %vm1303 = vcmask 1043459
    %v1304 = vsel %vm1303, %v904, %v1302
    %v1305 = vsel %vm112, %v1304, 0
    %1307 = vmatpush.msra.mxu0 0.0
    %1308 = vmatpush.msra.mxu0 0.0
    %1309 = vmatpush.msra.mxu0 0.0
    %1310 = vmatpush.msra.mxu0 0.0
    %1311 = vmatpush.msra.mxu0 0.0
    %1312 = vmatpush.msra.mxu0 0.0
    %1313 = vmatpush.msra.mxu0 0.0
    %1314 = vmatpush.msra.mxu0 0.0
    %1315 = vmatpush.msra.mxu0 0.0
    %1316 = vmatpush.msra.mxu0 0.0
    %1317 = vmatpush.msra.mxu0 0.0
    %1318 = vmatpush.msra.mxu0 0.0
    %v1319 = vand.u32 %v1294, 4294901760
    %1320 = vmatpush.msra.mxu0 %v1319
    %v1321 = vand.u32 %v1293, 4294901760
    %1322 = vmatpush.msra.mxu0 %v1321
    %v1323 = vand.u32 %v1292, 4294901760
    %1324 = vmatpush.msra.mxu0 %v1323
    %v1325 = vand.u32 %v1291, 4294901760
    %1326 = vmatpush.msra.mxu0 %v1325
    %v1327 = vand.u32 %v1305, 4294901760
    %v1328 = vsub.f32 %v1305, %v1327
    %v1329 = vand.u32 %v1328, 4294901760
    %v1330 = vsub.f32 %v1328, %v1329
    %v1331 = vand.u32 %v1330, 4294901760
    %1332 = vmatmul.f32.gmra.mxu0 %v1331
    %v1333 = vpop.f32.mrf.mxu0
    %v1334 = vadd.f32 0.0, %v1333
    %1335 = vdwg.mxu0
    %1336 = vmatpush.msra.mxu0 0.0
    %1337 = vmatpush.msra.mxu0 0.0
    %1338 = vmatpush.msra.mxu0 0.0
    %1339 = vmatpush.msra.mxu0 0.0
    %1340 = vmatpush.msra.mxu0 0.0
    %1341 = vmatpush.msra.mxu0 0.0
    %1342 = vmatpush.msra.mxu0 0.0
    %1343 = vmatpush.msra.mxu0 0.0
    %1344 = vmatpush.msra.mxu0 0.0
    %1345 = vmatpush.msra.mxu0 0.0
    %1346 = vmatpush.msra.mxu0 0.0
    %1347 = vmatpush.msra.mxu0 0.0
    %v1348 = vand.u32 %v1294, 4294901760
    %v1349 = vsub.f32 %v1294, %v1348
    %v1350 = vand.u32 %v1349, 4294901760
    %v1351 = vsub.f32 %v1349, %v1350
    %v1352 = vand.u32 %v1351, 4294901760
    %1353 = vmatpush.msra.mxu0 %v1352
    %v1354 = vand.u32 %v1293, 4294901760
    %v1355 = vsub.f32 %v1293, %v1354
    %v1356 = vand.u32 %v1355, 4294901760
    %v1357 = vsub.f32 %v1355, %v1356
    %v1358 = vand.u32 %v1357, 4294901760
    %1359 = vmatpush.msra.mxu0 %v1358
    %v1360 = vand.u32 %v1292, 4294901760
    %v1361 = vsub.f32 %v1292, %v1360
    %v1362 = vand.u32 %v1361, 4294901760
    %v1363 = vsub.f32 %v1361, %v1362
    %v1364 = vand.u32 %v1363, 4294901760
    %1365 = vmatpush.msra.mxu0 %v1364
    %v1366 = vand.u32 %v1291, 4294901760
    %v1367 = vsub.f32 %v1291, %v1366
    %v1368 = vand.u32 %v1367, 4294901760
    %v1369 = vsub.f32 %v1367, %v1368
    %v1370 = vand.u32 %v1369, 4294901760
    %1371 = vmatpush.msra.mxu0 %v1370
    %v1372 = vand.u32 %v1305, 4294901760
    %1373 = vmatmul.f32.gmra.mxu0 %v1372
    %v1374 = vpop.f32.mrf.mxu0
    %v1375 = vadd.f32 %v1334, %v1374
    %1376 = vdwg.mxu0
    %1377 = vmatpush.msra.mxu0 0.0
    %1378 = vmatpush.msra.mxu0 0.0
    %1379 = vmatpush.msra.mxu0 0.0
    %1380 = vmatpush.msra.mxu0 0.0
    %1381 = vmatpush.msra.mxu0 0.0
    %1382 = vmatpush.msra.mxu0 0.0
    %1383 = vmatpush.msra.mxu0 0.0
    %1384 = vmatpush.msra.mxu0 0.0
    %1385 = vmatpush.msra.mxu0 0.0
    %1386 = vmatpush.msra.mxu0 0.0
    %1387 = vmatpush.msra.mxu0 0.0
    %1388 = vmatpush.msra.mxu0 0.0
    %v1389 = vand.u32 %v1294, 4294901760
    %v1390 = vsub.f32 %v1294, %v1389
    %1391 = vmatpush.msra.mxu0 %v1390
    %v1392 = vand.u32 %v1293, 4294901760
    %v1393 = vsub.f32 %v1293, %v1392
    %1394 = vmatpush.msra.mxu0 %v1393
    %v1395 = vand.u32 %v1292, 4294901760
    %v1396 = vsub.f32 %v1292, %v1395
    %1397 = vmatpush.msra.mxu0 %v1396
    %v1398 = vand.u32 %v1291, 4294901760
    %v1399 = vsub.f32 %v1291, %v1398
    %1400 = vmatpush.msra.mxu0 %v1399
    %v1401 = vand.u32 %v1305, 4294901760
    %v1402 = vsub.f32 %v1305, %v1401
    %1403 = vmatmul.f32.gmra.mxu0 %v1402
    %v1404 = vpop.f32.mrf.mxu0
    %v1405 = vadd.f32 %v1375, %v1404
    %1406 = vdwg.mxu0
    %1407 = vmatpush.msra.mxu0 0.0
    %1408 = vmatpush.msra.mxu0 0.0
    %1409 = vmatpush.msra.mxu0 0.0
    %1410 = vmatpush.msra.mxu0 0.0
    %1411 = vmatpush.msra.mxu0 0.0
    %1412 = vmatpush.msra.mxu0 0.0
    %1413 = vmatpush.msra.mxu0 0.0
    %1414 = vmatpush.msra.mxu0 0.0
    %1415 = vmatpush.msra.mxu0 0.0
    %1416 = vmatpush.msra.mxu0 0.0
    %1417 = vmatpush.msra.mxu0 0.0
    %1418 = vmatpush.msra.mxu0 0.0
    %v1419 = vand.u32 %v1294, 4294901760
    %1420 = vmatpush.msra.mxu0 %v1419
    %v1421 = vand.u32 %v1293, 4294901760
    %1422 = vmatpush.msra.mxu0 %v1421
    %v1423 = vand.u32 %v1292, 4294901760
    %1424 = vmatpush.msra.mxu0 %v1423
    %v1425 = vand.u32 %v1291, 4294901760
    %1426 = vmatpush.msra.mxu0 %v1425
    %v1427 = vand.u32 %v1305, 4294901760
    %v1428 = vsub.f32 %v1305, %v1427
    %v1429 = vand.u32 %v1428, 4294901760
    %1430 = vmatmul.f32.gmra.mxu0 %v1429
    %v1431 = vpop.f32.mrf.mxu0
    %v1432 = vadd.f32 %v1405, %v1431
    %1433 = vdwg.mxu0
    %1434 = vmatpush.msra.mxu0 0.0
    %1435 = vmatpush.msra.mxu0 0.0
    %1436 = vmatpush.msra.mxu0 0.0
    %1437 = vmatpush.msra.mxu0 0.0
    %1438 = vmatpush.msra.mxu0 0.0
    %1439 = vmatpush.msra.mxu0 0.0
    %1440 = vmatpush.msra.mxu0 0.0
    %1441 = vmatpush.msra.mxu0 0.0
    %1442 = vmatpush.msra.mxu0 0.0
    %1443 = vmatpush.msra.mxu0 0.0
    %1444 = vmatpush.msra.mxu0 0.0
    %1445 = vmatpush.msra.mxu0 0.0
    %v1446 = vand.u32 %v1294, 4294901760
    %v1447 = vsub.f32 %v1294, %v1446
    %v1448 = vand.u32 %v1447, 4294901760
    %1449 = vmatpush.msra.mxu0 %v1448
    %v1450 = vand.u32 %v1293, 4294901760
    %v1451 = vsub.f32 %v1293, %v1450
    %v1452 = vand.u32 %v1451, 4294901760
    %1453 = vmatpush.msra.mxu0 %v1452
    %v1454 = vand.u32 %v1292, 4294901760
    %v1455 = vsub.f32 %v1292, %v1454
    %v1456 = vand.u32 %v1455, 4294901760
    %1457 = vmatpush.msra.mxu0 %v1456
    %v1458 = vand.u32 %v1291, 4294901760
    %v1459 = vsub.f32 %v1291, %v1458
    %v1460 = vand.u32 %v1459, 4294901760
    %1461 = vmatpush.msra.mxu0 %v1460
    %v1462 = vand.u32 %v1305, 4294901760
    %1463 = vmatmul.f32.gmra.mxu0 %v1462
    %v1464 = vpop.f32.mrf.mxu0
    %v1465 = vadd.f32 %v1432, %v1464
    %1466 = vdwg.mxu0
    %1467 = vmatpush.msra.mxu0 0.0
    %1468 = vmatpush.msra.mxu0 0.0
    %1469 = vmatpush.msra.mxu0 0.0
    %1470 = vmatpush.msra.mxu0 0.0
    %1471 = vmatpush.msra.mxu0 0.0
    %1472 = vmatpush.msra.mxu0 0.0
    %1473 = vmatpush.msra.mxu0 0.0
    %1474 = vmatpush.msra.mxu0 0.0
    %1475 = vmatpush.msra.mxu0 0.0
    %1476 = vmatpush.msra.mxu0 0.0
    %1477 = vmatpush.msra.mxu0 0.0
    %1478 = vmatpush.msra.mxu0 0.0
    %v1479 = vand.u32 %v1294, 4294901760
    %1480 = vmatpush.msra.mxu0 %v1479
    %v1481 = vand.u32 %v1293, 4294901760
    %1482 = vmatpush.msra.mxu0 %v1481
    %v1483 = vand.u32 %v1292, 4294901760
    %1484 = vmatpush.msra.mxu0 %v1483
    %v1485 = vand.u32 %v1291, 4294901760
    %1486 = vmatpush.msra.mxu0 %v1485
    %v1487 = vand.u32 %v1305, 4294901760
    %1488 = vmatmul.f32.gmra.mxu0 %v1487
    %v1489 = vpop.f32.mrf.mxu0
    %v1490 = vadd.f32 %v1465, %v1489
    %1491 = vdwg.mxu0
    %v1493 = vsel %vm112, %v1286, 0
    %1495 = vmatpush.msra.mxu0 0.0
    %1496 = vmatpush.msra.mxu0 0.0
    %1497 = vmatpush.msra.mxu0 0.0
    %1498 = vmatpush.msra.mxu0 0.0
    %1499 = vmatpush.msra.mxu0 0.0
    %1500 = vmatpush.msra.mxu0 0.0
    %1501 = vmatpush.msra.mxu0 0.0
    %1502 = vmatpush.msra.mxu0 0.0
    %1503 = vmatpush.msra.mxu0 0.0
    %1504 = vmatpush.msra.mxu0 0.0
    %1505 = vmatpush.msra.mxu0 0.0
    %1506 = vmatpush.msra.mxu0 0.0
    %v1507 = vand.u32 %v1290, 4294901760
    %1508 = vmatpush.msra.mxu0 %v1507
    %v1509 = vand.u32 %v1289, 4294901760
    %1510 = vmatpush.msra.mxu0 %v1509
    %v1511 = vand.u32 %v1288, 4294901760
    %1512 = vmatpush.msra.mxu0 %v1511
    %v1513 = vand.u32 %v1287, 4294901760
    %1514 = vmatpush.msra.mxu0 %v1513
    %v1515 = vand.u32 %v1493, 4294901760
    %v1516 = vsub.f32 %v1493, %v1515
    %v1517 = vand.u32 %v1516, 4294901760
    %v1518 = vsub.f32 %v1516, %v1517
    %v1519 = vand.u32 %v1518, 4294901760
    %1520 = vmatmul.f32.gmra.mxu0 %v1519
    %v1521 = vpop.f32.mrf.mxu0
    %v1522 = vadd.f32 %v1490, %v1521
    %1523 = vdwg.mxu0
    %1524 = vmatpush.msra.mxu0 0.0
    %1525 = vmatpush.msra.mxu0 0.0
    %1526 = vmatpush.msra.mxu0 0.0
    %1527 = vmatpush.msra.mxu0 0.0
    %1528 = vmatpush.msra.mxu0 0.0
    %1529 = vmatpush.msra.mxu0 0.0
    %1530 = vmatpush.msra.mxu0 0.0
    %1531 = vmatpush.msra.mxu0 0.0
    %1532 = vmatpush.msra.mxu0 0.0
    %1533 = vmatpush.msra.mxu0 0.0
    %1534 = vmatpush.msra.mxu0 0.0
    %1535 = vmatpush.msra.mxu0 0.0
    %v1536 = vand.u32 %v1290, 4294901760
    %v1537 = vsub.f32 %v1290, %v1536
    %v1538 = vand.u32 %v1537, 4294901760
    %v1539 = vsub.f32 %v1537, %v1538
    %v1540 = vand.u32 %v1539, 4294901760
    %1541 = vmatpush.msra.mxu0 %v1540
    %v1542 = vand.u32 %v1289, 4294901760
    %v1543 = vsub.f32 %v1289, %v1542
    %v1544 = vand.u32 %v1543, 4294901760
    %v1545 = vsub.f32 %v1543, %v1544
    %v1546 = vand.u32 %v1545, 4294901760
    %1547 = vmatpush.msra.mxu0 %v1546
    %v1548 = vand.u32 %v1288, 4294901760
    %v1549 = vsub.f32 %v1288, %v1548
    %v1550 = vand.u32 %v1549, 4294901760
    %v1551 = vsub.f32 %v1549, %v1550
    %v1552 = vand.u32 %v1551, 4294901760
    %1553 = vmatpush.msra.mxu0 %v1552
    %v1554 = vand.u32 %v1287, 4294901760
    %v1555 = vsub.f32 %v1287, %v1554
    %v1556 = vand.u32 %v1555, 4294901760
    %v1557 = vsub.f32 %v1555, %v1556
    %v1558 = vand.u32 %v1557, 4294901760
    %1559 = vmatpush.msra.mxu0 %v1558
    %v1560 = vand.u32 %v1493, 4294901760
    %1561 = vmatmul.f32.gmra.mxu0 %v1560
    %v1562 = vpop.f32.mrf.mxu0
    %v1563 = vadd.f32 %v1522, %v1562
    %1564 = vdwg.mxu0
    %1565 = vmatpush.msra.mxu0 0.0
    %1566 = vmatpush.msra.mxu0 0.0
    %1567 = vmatpush.msra.mxu0 0.0
    %1568 = vmatpush.msra.mxu0 0.0
    %1569 = vmatpush.msra.mxu0 0.0
    %1570 = vmatpush.msra.mxu0 0.0
    %1571 = vmatpush.msra.mxu0 0.0
    %1572 = vmatpush.msra.mxu0 0.0
    %1573 = vmatpush.msra.mxu0 0.0
    %1574 = vmatpush.msra.mxu0 0.0
    %1575 = vmatpush.msra.mxu0 0.0
    %1576 = vmatpush.msra.mxu0 0.0
    %v1577 = vand.u32 %v1290, 4294901760
    %v1578 = vsub.f32 %v1290, %v1577
    %1579 = vmatpush.msra.mxu0 %v1578
    %v1580 = vand.u32 %v1289, 4294901760
    %v1581 = vsub.f32 %v1289, %v1580
    %1582 = vmatpush.msra.mxu0 %v1581
    %v1583 = vand.u32 %v1288, 4294901760
    %v1584 = vsub.f32 %v1288, %v1583
    %1585 = vmatpush.msra.mxu0 %v1584
    %v1586 = vand.u32 %v1287, 4294901760
    %v1587 = vsub.f32 %v1287, %v1586
    %1588 = vmatpush.msra.mxu0 %v1587
    %v1589 = vand.u32 %v1493, 4294901760
    %v1590 = vsub.f32 %v1493, %v1589
    %1591 = vmatmul.f32.gmra.mxu0 %v1590
    %v1592 = vpop.f32.mrf.mxu0
    %v1593 = vadd.f32 %v1563, %v1592
    %1594 = vdwg.mxu0
    %1595 = vmatpush.msra.mxu0 0.0
    %1596 = vmatpush.msra.mxu0 0.0
    %1597 = vmatpush.msra.mxu0 0.0
    %1598 = vmatpush.msra.mxu0 0.0
    %1599 = vmatpush.msra.mxu0 0.0
    %1600 = vmatpush.msra.mxu0 0.0
    %1601 = vmatpush.msra.mxu0 0.0
    %1602 = vmatpush.msra.mxu0 0.0
    %1603 = vmatpush.msra.mxu0 0.0
    %1604 = vmatpush.msra.mxu0 0.0
    %1605 = vmatpush.msra.mxu0 0.0
    %1606 = vmatpush.msra.mxu0 0.0
    %v1607 = vand.u32 %v1290, 4294901760
    %1608 = vmatpush.msra.mxu0 %v1607
    %v1609 = vand.u32 %v1289, 4294901760
    %1610 = vmatpush.msra.mxu0 %v1609
    %v1611 = vand.u32 %v1288, 4294901760
    %1612 = vmatpush.msra.mxu0 %v1611
    %v1613 = vand.u32 %v1287, 4294901760
    %1614 = vmatpush.msra.mxu0 %v1613
    %v1615 = vand.u32 %v1493, 4294901760
    %v1616 = vsub.f32 %v1493, %v1615
    %v1617 = vand.u32 %v1616, 4294901760
    %1618 = vmatmul.f32.gmra.mxu0 %v1617
    %v1619 = vpop.f32.mrf.mxu0
    %v1620 = vadd.f32 %v1593, %v1619
    %1621 = vdwg.mxu0
    %1622 = vmatpush.msra.mxu0 0.0
    %1623 = vmatpush.msra.mxu0 0.0
    %1624 = vmatpush.msra.mxu0 0.0
    %1625 = vmatpush.msra.mxu0 0.0
    %1626 = vmatpush.msra.mxu0 0.0
    %1627 = vmatpush.msra.mxu0 0.0
    %1628 = vmatpush.msra.mxu0 0.0
    %1629 = vmatpush.msra.mxu0 0.0
    %1630 = vmatpush.msra.mxu0 0.0
    %1631 = vmatpush.msra.mxu0 0.0
    %1632 = vmatpush.msra.mxu0 0.0
    %1633 = vmatpush.msra.mxu0 0.0
    %v1634 = vand.u32 %v1290, 4294901760
    %v1635 = vsub.f32 %v1290, %v1634
    %v1636 = vand.u32 %v1635, 4294901760
    %1637 = vmatpush.msra.mxu0 %v1636
    %v1638 = vand.u32 %v1289, 4294901760
    %v1639 = vsub.f32 %v1289, %v1638
    %v1640 = vand.u32 %v1639, 4294901760
    %1641 = vmatpush.msra.mxu0 %v1640
    %v1642 = vand.u32 %v1288, 4294901760
    %v1643 = vsub.f32 %v1288, %v1642
    %v1644 = vand.u32 %v1643, 4294901760
    %1645 = vmatpush.msra.mxu0 %v1644
    %v1646 = vand.u32 %v1287, 4294901760
    %v1647 = vsub.f32 %v1287, %v1646
    %v1648 = vand.u32 %v1647, 4294901760
    %1649 = vmatpush.msra.mxu0 %v1648
    %v1650 = vand.u32 %v1493, 4294901760
    %1651 = vmatmul.f32.gmra.mxu0 %v1650
    %v1652 = vpop.f32.mrf.mxu0
    %v1653 = vadd.f32 %v1620, %v1652
    %1654 = vdwg.mxu0
    %1655 = vmatpush.msra.mxu0 0.0
    %1656 = vmatpush.msra.mxu0 0.0
    %1657 = vmatpush.msra.mxu0 0.0
    %1658 = vmatpush.msra.mxu0 0.0
    %1659 = vmatpush.msra.mxu0 0.0
    %1660 = vmatpush.msra.mxu0 0.0
    %1661 = vmatpush.msra.mxu0 0.0
    %1662 = vmatpush.msra.mxu0 0.0
    %1663 = vmatpush.msra.mxu0 0.0
    %1664 = vmatpush.msra.mxu0 0.0
    %1665 = vmatpush.msra.mxu0 0.0
    %1666 = vmatpush.msra.mxu0 0.0
    %v1667 = vand.u32 %v1290, 4294901760
    %1668 = vmatpush.msra.mxu0 %v1667
    %v1669 = vand.u32 %v1289, 4294901760
    %1670 = vmatpush.msra.mxu0 %v1669
    %v1671 = vand.u32 %v1288, 4294901760
    %1672 = vmatpush.msra.mxu0 %v1671
    %v1673 = vand.u32 %v1287, 4294901760
    %1674 = vmatpush.msra.mxu0 %v1673
    %v1675 = vand.u32 %v1493, 4294901760
    %1676 = vmatmul.f32.gmra.mxu0 %v1675
    %v1677 = vpop.f32.mrf.mxu0
    %v1678 = vadd.f32 %v1653, %v1677
    %1679 = vdwg.mxu0
    %v1680 = vld [vmem:[%s14] sm:$0x1]
    %v1682 = vperm.slane %v1680, 0
    %v1684 = vadd.f32 %v1678, %v1682
    %v1685 = vxor.u32 %v1684, 2147483648
    %v1686 = vmul.f32 %v1685, 1.442695
    %v1687 = vpow.pop %v1686
    %v1688 = vadd.f32 %v1687, 1.0
    %v1689 = vrcp.pop %v1688
    %v1690 = vmul.f32 %v1688, %v1689
    %v1691 = vsub.f32 1.0, %v1690
    %v1692 = vmul.f32 %v1689, %v1691
    %v1693 = vadd.f32 %v1689, %v1692
    %vm1694 = vweird.f32 %v1688
    %vm1695 = vweird.f32 %v1689
    %vm1696 = vmor %vm1694, %vm1695
    %v1697 = vsel %vm1696, %v1689, %v1693
    %v1698 = vand.u32 2147483647, %v1688
    %vm1699 = vcmp.eq.f32.partialorder %v1698, 8.507059e+37
    %v1700 = vand.u32 %v1688, 2147483648
    %v1701 = vor.u32 1.1754944e-38, %v1700
    %v1702 = vsel %vm1699, %v1701, %v1697
    %v1703 = vmul.f32 1.0, %v1702
    %v1704 = vmul.f32 %v1703, %v1286
    %v1705 = vsub.f32 1.0, %v1703
    %v1707 = vmul.f32 %v1705, %v1304
    %v1708 = vadd.f32 %v1704, %v1707
    %vm1709 = vcmask 257024
    %1710 = vst.msk [vmem:[#allocation9] sm:$0xf] %vm1709, %v1708
    // Predicated region
    $region74: #{tpu_custom_call.1} parent=1 // pred_check
      _
    $region75: #{tpu_custom_call.1} parent=1 // pred_check_branch
      %1712 = sbr.rel (0) target = $region77
    $region76: #{tpu_custom_call.1} parent=1 // pred_region
      %1714 = vsyncadd [#allocation5], 0
      %s1716 = sshll.u32 [#allocation9], 4
      %s1717 = int_to_ptr.vmem [resolvable:$true] %s1716
      %s1718 = sshll.u32 %s15, 4
      %s1719 = int_to_ptr.hbm [resolvable:$true] %s1718
      %1721 = dma.vmem_to_hbm [thread:$0]  %s1717, 64, %s1719, [#allocation5]
    $region77: #{tpu_custom_call.1} parent=1 // pred_fallthru
      _
    // Predicated region
    $region78: #{tpu_custom_call.1} parent=1 // pred_check
      _
    $region79: #{tpu_custom_call.1} parent=1 // pred_check_branch
      %1723 = sbr.rel (0) target = $region81
    $region80: #{tpu_custom_call.1} parent=1 // pred_region
      %1725 = dma.done [#allocation5], 64
    $region81: #{tpu_custom_call.1} parent=1 // pred_fallthru
      _
    %1726 = vsyncpa [#allocation4], 1
    %1727 = vsyncpa [#allocation7], 1
    %1728 = vsyncpa [#allocation5], 1

</llo_original>
